<compile_context>
chip_gen: v5e
topology: v5e:2x2
jax: 0.10.0
libtpu: 0.0.40
codegen_flags: <defaults>
</compile_context>

<pallas_src>
import functools
import random as pyrandom

import jax
import jax.numpy as jnp
from jax.experimental import pallas as pl
from jax.experimental.pallas import tpu as pltpu


# ------------------------------------------------------------------ helpers --

def _lstm_cell(xh, c, w_cat, b, H):
    """One LSTM cell step from concatenated [x, h] and stacked [w_ih; w_hh]."""
    gates = jnp.dot(xh, w_cat, preferred_element_type=jnp.float32) + b
    i = jax.nn.sigmoid(gates[:, 0 * H:1 * H])
    f = jax.nn.sigmoid(gates[:, 1 * H:2 * H])
    g = jnp.tanh(gates[:, 2 * H:3 * H])
    o = jax.nn.sigmoid(gates[:, 3 * H:4 * H])
    c_new = f * c + i * g
    h_new = o * jnp.tanh(c_new)
    return h_new, c_new


# ------------------------------------------------------------------ kernels --

def _encoder_kernel(x_ref, w_cat_ref, b_ref, h_out, c_out, h_sc, c_sc, *, H):
    """Grid axis 0 = source time step (recurrent, 'arbitrary')."""
    t = pl.program_id(0)

    @pl.when(t == 0)
    def _():
        h_sc[...] = jnp.zeros_like(h_sc)
        c_sc[...] = jnp.zeros_like(c_sc)

    x = x_ref[0]                                         # (B, E) embedded source token
    xh = jnp.concatenate([x, h_sc[...]], axis=-1)        # (B, E + H)
    h_new, c_new = _lstm_cell(xh, c_sc[...], w_cat_ref[...], b_ref[...], H)
    h_sc[...] = h_new
    c_sc[...] = c_new

    @pl.when(t == pl.num_programs(0) - 1)                # only the final state matters
    def _():
        h_out[...] = h_new
        c_out[...] = c_new


def _decoder_kernel(flags_ref,                 # SMEM (tgt_len,) int32 teacher-force flags
                    tgt_oh_ref,                # (1, B, V) one-hot of target[s]
                    h0_ref, c0_ref,            # (B, H) encoder final state
                    emb_ref,                   # (V, E) decoder embedding
                    w_cat_ref, b_ref,          # (E+H, 4H), (1, 4H)
                    wfc_ref, bfc_ref,          # (H, V), (1, V)
                    logits_out,                # (1, B, V) output block at step s
                    h_sc, c_sc, best_sc,       # VMEM scratch: (B,H), (B,H), (B,V)
                    *, H):
    """Grid axis 0 = decoder step s (PyTorch t = s + 1), recurrent ('arbitrary')."""
    s = pl.program_id(0)

    @pl.when(s == 0)
    def _():
        h_sc[...] = h0_ref[...]
        c_sc[...] = c0_ref[...]
        best_sc[...] = jnp.zeros_like(best_sc)

    # Input token (one-hot): target[0] at s==0, otherwise the coin flip from the
    # previous iteration chooses between target[s] (teacher) and the previous
    # step's argmax (best_sc).
    use_tgt = jnp.logical_or(s == 0, flags_ref[s] != 0)
    x_oh = jnp.where(use_tgt, tgt_oh_ref[0], best_sc[...])          # (B, V)

    x_emb = jnp.dot(x_oh, emb_ref[...], preferred_element_type=jnp.float32)   # (B, E)
    xh = jnp.concatenate([x_emb, h_sc[...]], axis=-1)                          # (B, E + H)
    h_new, c_new = _lstm_cell(xh, c_sc[...], w_cat_ref[...], b_ref[...], H)
    h_sc[...] = h_new
    c_sc[...] = c_new

    logits = (jnp.dot(h_new, wfc_ref[...], preferred_element_type=jnp.float32)
              + bfc_ref[...])                                                  # (B, V)
    logits_out[0] = logits

    # one-hot(argmax(logits)) for the next step, first-max tie-break.
    V = logits.shape[-1]
    col = jax.lax.broadcasted_iota(jnp.int32, logits.shape, 1)
    m = jnp.max(logits, axis=-1, keepdims=True)
    best_idx = jnp.min(jnp.where(logits == m, col, V), axis=-1, keepdims=True)
    best_sc[...] = (col == best_idx).astype(jnp.float32)


# ----------------------------------------------------------------- wrappers --

def encoder_forward(src_emb, w_cat, b):
    src_len, B, E = src_emb.shape
    H = w_cat.shape[1] // 4
    kernel = functools.partial(_encoder_kernel, H=H)
    h, c = pl.pallas_call(
        kernel,
        out_shape=(jax.ShapeDtypeStruct((B, H), jnp.float32),
                   jax.ShapeDtypeStruct((B, H), jnp.float32)),
        grid_spec=pltpu.PrefetchScalarGridSpec(
            num_scalar_prefetch=0,
            grid=(src_len,),
            in_specs=[
                pl.BlockSpec((1, B, E), lambda t: (t, 0, 0)),
                pl.BlockSpec((E + H, 4 * H), lambda t: (0, 0)),
                pl.BlockSpec((1, 4 * H), lambda t: (0, 0)),
            ],
            out_specs=[
                pl.BlockSpec((B, H), lambda t: (0, 0)),
                pl.BlockSpec((B, H), lambda t: (0, 0)),
            ],
            scratch_shapes=[pltpu.VMEM((B, H), jnp.float32),
                            pltpu.VMEM((B, H), jnp.float32)],
        ),
        compiler_params=pltpu.CompilerParams(
            dimension_semantics=("arbitrary",)),
    )(src_emb, w_cat, b)
    return h, c


def decoder_forward(tf_flags, tgt_oh, h0, c0, emb, w_cat, b, w_fc, b_fc):
    tgt_len, B, V = tgt_oh.shape
    H = h0.shape[1]
    E = emb.shape[1]
    n_steps = tgt_len - 1
    kernel = functools.partial(_decoder_kernel, H=H)
    logits = pl.pallas_call(
        kernel,
        out_shape=jax.ShapeDtypeStruct((n_steps, B, V), jnp.float32),
        grid_spec=pltpu.PrefetchScalarGridSpec(
            num_scalar_prefetch=1,
            grid=(n_steps,),
            in_specs=[
                pl.BlockSpec((1, B, V), lambda s, flags: (s, 0, 0)),        # target one-hot
                pl.BlockSpec((B, H), lambda s, flags: (0, 0)),               # h0
                pl.BlockSpec((B, H), lambda s, flags: (0, 0)),               # c0
                pl.BlockSpec((V, E), lambda s, flags: (0, 0)),               # dec embedding
                pl.BlockSpec((E + H, 4 * H), lambda s, flags: (0, 0)),       # [w_ih; w_hh]
                pl.BlockSpec((1, 4 * H), lambda s, flags: (0, 0)),           # bias
                pl.BlockSpec((H, V), lambda s, flags: (0, 0)),               # w_fc
                pl.BlockSpec((1, V), lambda s, flags: (0, 0)),               # b_fc
            ],
            out_specs=pl.BlockSpec((1, B, V), lambda s, flags: (s, 0, 0)),
            scratch_shapes=[pltpu.VMEM((B, H), jnp.float32),
                            pltpu.VMEM((B, H), jnp.float32),
                            pltpu.VMEM((B, V), jnp.float32)],
        ),
        compiler_params=pltpu.CompilerParams(
            dimension_semantics=("arbitrary",),
            vmem_limit_bytes=64 * 1024 * 1024),
    )(tf_flags, tgt_oh, h0, c0, emb, w_cat, b, w_fc, b_fc)
    return logits


@jax.jit
def seq2seq_forward(params, source, target, tf_flags):
    """source/target: (len, B) int32.  tf_flags: (tgt_len,) int32 coin flips."""
    tgt_len, B = target.shape
    V = params["dec_w_fc"].shape[1]

    # Encoder: embed the whole source sequence once, run the recurrent kernel.
    src_emb = jnp.take(params["enc_emb"], source, axis=0)          # (src_len, B, E)
    h0, c0 = encoder_forward(src_emb, params["enc_w_cat"], params["enc_b"])

    # Decoder: entire decode loop fused into one kernel.
    tgt_oh = jax.nn.one_hot(target, V, dtype=jnp.float32)          # (tgt_len, B, V)
    dec_logits = decoder_forward(tf_flags, tgt_oh, h0, c0,
                                 params["dec_emb"], params["dec_w_cat"],
                                 params["dec_b"], params["dec_w_fc"],
                                 params["dec_b_fc"])

    # outputs[0] stays zeros, exactly like the PyTorch reference.
    return jnp.concatenate(
        [jnp.zeros((1, B, V), jnp.float32), dec_logits], axis=0)


# --------------------------------------------------------------------- main --

def init_params(key, src_vocab, tgt_vocab, E, H):
    ks = jax.random.split(key, 8)
    s = 1.0 / jnp.sqrt(H)
    u = lambda k, shape: jax.random.uniform(k, shape, jnp.float32, -s, s)
    return {
        "enc_emb":   u(ks[0], (src_vocab, E)),
        "enc_w_cat": u(ks[1], (E + H, 4 * H)),     # [w_ih; w_hh] stacked, transposed
        "enc_b":     u(ks[2], (1, 4 * H)),         # b_ih + b_hh folded
        "dec_emb":   u(ks[3], (tgt_vocab, E)),
        "dec_w_cat": u(ks[4], (E + H, 4 * H)),
        "dec_b":     u(ks[5], (1, 4 * H)),
        "dec_w_fc":  u(ks[6], (H, tgt_vocab)),
        "dec_b_fc":  u(ks[7], (1, tgt_vocab)),
    }


def make_teacher_force_flags(tgt_len, ratio, seed):
    """Host-side coin flips (same call order as the PyTorch loop); flags[0] unused."""
    rng = pyrandom.Random(seed)
    flips = [1] + [1 if rng.random() < ratio else 0 for _ in range(1, tgt_len)]
    return jnp.asarray(flips, dtype=jnp.int32)


if __name__ == "__main__":
    # Tile-aligned small shapes: B % 8 == 0, E/H/V % 128 == 0.
    SRC_VOCAB, TGT_VOCAB = 256, 256
    E, H = 128, 128
    B, SRC_LEN, TGT_LEN = 8, 8, 8
    assert B % 8 == 0 and E % 128 == 0 and H % 128 == 0 and TGT_VOCAB % 128 == 0

    key = jax.random.PRNGKey(0)
    kp, ks, kt = jax.random.split(key, 3)
    params = init_params(kp, SRC_VOCAB, TGT_VOCAB, E, H)
    source = jax.random.randint(ks, (SRC_LEN, B), 0, SRC_VOCAB, jnp.int32)
    target = jax.random.randint(kt, (TGT_LEN, B), 0, TGT_VOCAB, jnp.int32)
    tf_flags = make_teacher_force_flags(TGT_LEN, ratio=0.5, seed=0)

    outputs = seq2seq_forward(params, source, target, tf_flags)
    outputs = jax.block_until_ready(outputs)
    assert outputs.shape == (TGT_LEN, B, TGT_VOCAB)
    print("KERNEL_OK")
</pallas_src>

<mosaic_0001>
module attributes {stable_mosaic.version = 11 : i64} {
  func.func @_encoder_kernel(%arg0: i32, %arg1: memref<1x8x128xf32, #tpu.memory_space<vmem>>, %arg2: memref<256x512xf32, #tpu.memory_space<vmem>>, %arg3: memref<1x512xf32, #tpu.memory_space<vmem>>, %arg4: memref<8x128xf32, #tpu.memory_space<vmem>>, %arg5: memref<8x128xf32, #tpu.memory_space<vmem>>, %arg6: memref<8x128xf32, #tpu.memory_space<vmem>>, %arg7: memref<8x128xf32, #tpu.memory_space<vmem>>) attributes {dimension_semantics = [#tpu.dimension_semantics<arbitrary>], iteration_bounds = array<i64: 8>, scalar_prefetch = 0 : i64, scratch_operands = 2 : i64, tpu.core_type = #tpu.core_type<tc>, window_params = [{transform_indices = @transform_0, window_bounds = array<i64: 1, 8, 128>}, {pipeline_mode = #tpu.pipeline_mode<synchronous>, transform_indices = @transform_1, window_bounds = array<i64: 256, 512>}, {pipeline_mode = #tpu.pipeline_mode<synchronous>, transform_indices = @transform_2, window_bounds = array<i64: 1, 512>}, {pipeline_mode = #tpu.pipeline_mode<synchronous>, transform_indices = @transform_3, window_bounds = array<i64: 8, 128>}, {pipeline_mode = #tpu.pipeline_mode<synchronous>, transform_indices = @transform_4, window_bounds = array<i64: 8, 128>}]} {
    %c0_i32 = arith.constant 0 : i32
    %0 = arith.cmpi eq, %arg0, %c0_i32 : i32
    %1 = arith.extui %0 : i1 to i32
    %c0_i32_0 = arith.constant 0 : i32
    %2 = arith.cmpi ne, %1, %c0_i32_0 : i32
    scf.if %2 {
      %cst_19 = arith.constant 0.000000e+00 : f32
      %43 = vector.broadcast %cst_19 : f32 to vector<8x128xf32>
      %c0_20 = arith.constant 0 : index
      %c0_21 = arith.constant 0 : index
      %44 = vector.load %arg6[%c0_20, %c0_21] : memref<8x128xf32, #tpu.memory_space<vmem>>, vector<8x128xf32>
      tpu.vector_store %arg6[%c0_20, %c0_21], %43 {strides = array<i32>} : memref<8x128xf32, #tpu.memory_space<vmem>>, vector<8x128xf32>,
      %cst_22 = arith.constant 0.000000e+00 : f32
      %45 = vector.broadcast %cst_22 : f32 to vector<8x128xf32>
      %c0_23 = arith.constant 0 : index
      %c0_24 = arith.constant 0 : index
      %46 = vector.load %arg7[%c0_23, %c0_24] : memref<8x128xf32, #tpu.memory_space<vmem>>, vector<8x128xf32>
      tpu.vector_store %arg7[%c0_23, %c0_24], %45 {strides = array<i32>} : memref<8x128xf32, #tpu.memory_space<vmem>>, vector<8x128xf32>,
    } else {
    }
    %c0 = arith.constant 0 : index
    %c0_1 = arith.constant 0 : index
    %c0_2 = arith.constant 0 : index
    %3 = vector.load %arg1[%c0, %c0_1, %c0_2] : memref<1x8x128xf32, #tpu.memory_space<vmem>>, vector<1x8x128xf32>
    %4 = vector.shape_cast %3 : vector<1x8x128xf32> to vector<8x128xf32>
    %c0_3 = arith.constant 0 : index
    %c0_4 = arith.constant 0 : index
    %5 = vector.load %arg6[%c0_3, %c0_4] : memref<8x128xf32, #tpu.memory_space<vmem>>, vector<8x128xf32>
    %6 = tpu.concatenate %4, %5 in 1 : vector<8x128xf32>, vector<8x128xf32> -> vector<8x256xf32>
    %c0_5 = arith.constant 0 : index
    %c0_6 = arith.constant 0 : index
    %7 = vector.load %arg7[%c0_5, %c0_6] : memref<8x128xf32, #tpu.memory_space<vmem>>, vector<8x128xf32>
    %c0_7 = arith.constant 0 : index
    %c0_8 = arith.constant 0 : index
    %8 = vector.load %arg2[%c0_7, %c0_8] : memref<256x512xf32, #tpu.memory_space<vmem>>, vector<256x512xf32>
    %c0_9 = arith.constant 0 : index
    %c0_10 = arith.constant 0 : index
    %9 = vector.load %arg3[%c0_9, %c0_10] : memref<1x512xf32, #tpu.memory_space<vmem>>, vector<1x512xf32>
    %cst = arith.constant dense<0.000000e+00> : vector<8x512xf32>
    %10 = tpu.matmul %6, %8, %cst {dimension_numbers = #tpu.dot_dimension_numbers<[1], [0], [0], [1], [0, 0, 1, 1], [], []>} : vector<8x256xf32>, vector<256x512xf32>, vector<8x512xf32> -> vector<8x512xf32>
    %11 = vector.broadcast %9 : vector<1x512xf32> to vector<8x512xf32>
    %12 = arith.addf %10, %11 : vector<8x512xf32>
    %13 = vector.extract_strided_slice %12 {offsets = [0, 0], sizes = [8, 128], strides = [1, 1]} : vector<8x512xf32> to vector<8x128xf32>
    %14 = arith.negf %13 : vector<8x128xf32>
    %15 = math.exp %14 : vector<8x128xf32>
    %cst_11 = arith.constant 1.000000e+00 : f32
    %16 = vector.broadcast %cst_11 : f32 to vector<8x128xf32>
    %17 = arith.addf %16, %15 : vector<8x128xf32>
    %18 = arith.divf %16, %17 : vector<8x128xf32>
    %19 = vector.extract_strided_slice %12 {offsets = [0, 128], sizes = [8, 128], strides = [1, 1]} : vector<8x512xf32> to vector<8x128xf32>
    %20 = arith.negf %19 : vector<8x128xf32>
    %21 = math.exp %20 : vector<8x128xf32>
    %cst_12 = arith.constant 1.000000e+00 : f32
    %22 = vector.broadcast %cst_12 : f32 to vector<8x128xf32>
    %23 = arith.addf %22, %21 : vector<8x128xf32>
    %24 = arith.divf %22, %23 : vector<8x128xf32>
    %25 = vector.extract_strided_slice %12 {offsets = [0, 256], sizes = [8, 128], strides = [1, 1]} : vector<8x512xf32> to vector<8x128xf32>
    %26 = math.tanh %25 : vector<8x128xf32>
    %27 = vector.extract_strided_slice %12 {offsets = [0, 384], sizes = [8, 128], strides = [1, 1]} : vector<8x512xf32> to vector<8x128xf32>
    %28 = arith.negf %27 : vector<8x128xf32>
    %29 = math.exp %28 : vector<8x128xf32>
    %cst_13 = arith.constant 1.000000e+00 : f32
    %30 = vector.broadcast %cst_13 : f32 to vector<8x128xf32>
    %31 = arith.addf %30, %29 : vector<8x128xf32>
    %32 = arith.divf %30, %31 : vector<8x128xf32>
    %33 = arith.mulf %24, %7 : vector<8x128xf32>
    %34 = arith.mulf %18, %26 : vector<8x128xf32>
    %35 = arith.addf %33, %34 : vector<8x128xf32>
    %36 = math.tanh %35 : vector<8x128xf32>
    %37 = arith.mulf %32, %36 : vector<8x128xf32>
    %c0_14 = arith.constant 0 : index
    %c0_15 = arith.constant 0 : index
    %38 = vector.load %arg6[%c0_14, %c0_15] : memref<8x128xf32, #tpu.memory_space<vmem>>, vector<8x128xf32>
    tpu.vector_store %arg6[%c0_14, %c0_15], %37 {strides = array<i32>} : memref<8x128xf32, #tpu.memory_space<vmem>>, vector<8x128xf32>,
    %c0_16 = arith.constant 0 : index
    %c0_17 = arith.constant 0 : index
    %39 = vector.load %arg7[%c0_16, %c0_17] : memref<8x128xf32, #tpu.memory_space<vmem>>, vector<8x128xf32>
    tpu.vector_store %arg7[%c0_16, %c0_17], %35 {strides = array<i32>} : memref<8x128xf32, #tpu.memory_space<vmem>>, vector<8x128xf32>,
    %c7_i32 = arith.constant 7 : i32
    %40 = arith.cmpi eq, %arg0, %c7_i32 : i32
    %41 = arith.extui %40 : i1 to i32
    %c0_i32_18 = arith.constant 0 : i32
    %42 = arith.cmpi ne, %41, %c0_i32_18 : i32
    scf.if %42 {
      %c0_19 = arith.constant 0 : index
      %c0_20 = arith.constant 0 : index
      %43 = vector.load %arg4[%c0_19, %c0_20] : memref<8x128xf32, #tpu.memory_space<vmem>>, vector<8x128xf32>
      tpu.vector_store %arg4[%c0_19, %c0_20], %37 {strides = array<i32>} : memref<8x128xf32, #tpu.memory_space<vmem>>, vector<8x128xf32>,
      %c0_21 = arith.constant 0 : index
      %c0_22 = arith.constant 0 : index
      %44 = vector.load %arg5[%c0_21, %c0_22] : memref<8x128xf32, #tpu.memory_space<vmem>>, vector<8x128xf32>
      tpu.vector_store %arg5[%c0_21, %c0_22], %35 {strides = array<i32>} : memref<8x128xf32, #tpu.memory_space<vmem>>, vector<8x128xf32>,
    } else {
    }
    return
  }
  func.func @transform_0(%arg0: i32) -> (i32, i32, i32) {
    %c0_i32 = arith.constant 0 : i32
    %c0_i32_0 = arith.constant 0 : i32
    %c0_i32_1 = arith.constant 0 : i32
    return %arg0, %c0_i32, %c0_i32_0 : i32, i32, i32
  }
  func.func @transform_1(%arg0: i32) -> (i32, i32) {
    %c0_i32 = arith.constant 0 : i32
    %c0_i32_0 = arith.constant 0 : i32
    %c0_i32_1 = arith.constant 0 : i32
    return %c0_i32, %c0_i32_0 : i32, i32
  }
  func.func @transform_2(%arg0: i32) -> (i32, i32) {
    %c0_i32 = arith.constant 0 : i32
    %c0_i32_0 = arith.constant 0 : i32
    %c0_i32_1 = arith.constant 0 : i32
    return %c0_i32, %c0_i32_0 : i32, i32
  }
  func.func @transform_3(%arg0: i32) -> (i32, i32) {
    %c0_i32 = arith.constant 0 : i32
    %c0_i32_0 = arith.constant 0 : i32
    %c0_i32_1 = arith.constant 0 : i32
    return %c0_i32, %c0_i32_0 : i32, i32
  }
  func.func @transform_4(%arg0: i32) -> (i32, i32) {
    %c0_i32 = arith.constant 0 : i32
    %c0_i32_0 = arith.constant 0 : i32
    %c0_i32_1 = arith.constant 0 : i32
    return %c0_i32, %c0_i32_0 : i32, i32
  }
}

module attributes {stable_mosaic.version = 11 : i64} {
  func.func @_decoder_kernel(%arg0: i32, %arg1: memref<8xi32, #tpu.memory_space<smem>>, %arg2: memref<1x8x256xf32, #tpu.memory_space<vmem>>, %arg3: memref<8x128xf32, #tpu.memory_space<vmem>>, %arg4: memref<8x128xf32, #tpu.memory_space<vmem>>, %arg5: memref<256x128xf32, #tpu.memory_space<vmem>>, %arg6: memref<256x512xf32, #tpu.memory_space<vmem>>, %arg7: memref<1x512xf32, #tpu.memory_space<vmem>>, %arg8: memref<128x256xf32, #tpu.memory_space<vmem>>, %arg9: memref<1x256xf32, #tpu.memory_space<vmem>>, %arg10: memref<1x8x256xf32, #tpu.memory_space<vmem>>, %arg11: memref<8x128xf32, #tpu.memory_space<vmem>>, %arg12: memref<8x128xf32, #tpu.memory_space<vmem>>, %arg13: memref<8x256xf32, #tpu.memory_space<vmem>>) attributes {dimension_semantics = [#tpu.dimension_semantics<arbitrary>], iteration_bounds = array<i64: 7>, scalar_prefetch = 1 : i64, scratch_operands = 3 : i64, tpu.core_type = #tpu.core_type<tc>, window_params = [{transform_indices = @transform_0, window_bounds = array<i64: 1, 8, 256>}, {pipeline_mode = #tpu.pipeline_mode<synchronous>, transform_indices = @transform_1, window_bounds = array<i64: 8, 128>}, {pipeline_mode = #tpu.pipeline_mode<synchronous>, transform_indices = @transform_2, window_bounds = array<i64: 8, 128>}, {pipeline_mode = #tpu.pipeline_mode<synchronous>, transform_indices = @transform_3, window_bounds = array<i64: 256, 128>}, {pipeline_mode = #tpu.pipeline_mode<synchronous>, transform_indices = @transform_4, window_bounds = array<i64: 256, 512>}, {pipeline_mode = #tpu.pipeline_mode<synchronous>, transform_indices = @transform_5, window_bounds = array<i64: 1, 512>}, {pipeline_mode = #tpu.pipeline_mode<synchronous>, transform_indices = @transform_6, window_bounds = array<i64: 128, 256>}, {pipeline_mode = #tpu.pipeline_mode<synchronous>, transform_indices = @transform_7, window_bounds = array<i64: 1, 256>}, {transform_indices = @transform_8, window_bounds = array<i64: 1, 8, 256>}]} {
    %c0_i32 = arith.constant 0 : i32
    %0 = arith.cmpi eq, %arg0, %c0_i32 : i32
    %1 = arith.extui %0 : i1 to i32
    %c0_i32_0 = arith.constant 0 : i32
    %2 = arith.cmpi ne, %1, %c0_i32_0 : i32
    scf.if %2 {
      %c0_37 = arith.constant 0 : index
      %c0_38 = arith.constant 0 : index
      %71 = vector.load %arg3[%c0_37, %c0_38] : memref<8x128xf32, #tpu.memory_space<vmem>>, vector<8x128xf32>
      %c0_39 = arith.constant 0 : index
      %c0_40 = arith.constant 0 : index
      %72 = vector.load %arg11[%c0_39, %c0_40] : memref<8x128xf32, #tpu.memory_space<vmem>>, vector<8x128xf32>
      tpu.vector_store %arg11[%c0_39, %c0_40], %71 {strides = array<i32>} : memref<8x128xf32, #tpu.memory_space<vmem>>, vector<8x128xf32>,
      %c0_41 = arith.constant 0 : index
      %c0_42 = arith.constant 0 : index
      %73 = vector.load %arg4[%c0_41, %c0_42] : memref<8x128xf32, #tpu.memory_space<vmem>>, vector<8x128xf32>
      %c0_43 = arith.constant 0 : index
      %c0_44 = arith.constant 0 : index
      %74 = vector.load %arg12[%c0_43, %c0_44] : memref<8x128xf32, #tpu.memory_space<vmem>>, vector<8x128xf32>
      tpu.vector_store %arg12[%c0_43, %c0_44], %73 {strides = array<i32>} : memref<8x128xf32, #tpu.memory_space<vmem>>, vector<8x128xf32>,
      %cst_45 = arith.constant 0.000000e+00 : f32
      %75 = vector.broadcast %cst_45 : f32 to vector<8x256xf32>
      %c0_46 = arith.constant 0 : index
      %c0_47 = arith.constant 0 : index
      %76 = vector.load %arg13[%c0_46, %c0_47] : memref<8x256xf32, #tpu.memory_space<vmem>>, vector<8x256xf32>
      tpu.vector_store %arg13[%c0_46, %c0_47], %75 {strides = array<i32>} : memref<8x256xf32, #tpu.memory_space<vmem>>, vector<8x256xf32>,
    } else {
    }
    %c0_i32_1 = arith.constant 0 : i32
    %3 = arith.cmpi eq, %arg0, %c0_i32_1 : i32
    %4 = arith.index_cast %arg0 : i32 to index
    %5 = memref.load %arg1[%4] : memref<8xi32, #tpu.memory_space<smem>>
    %c0_i32_2 = arith.constant 0 : i32
    %6 = arith.cmpi ne, %5, %c0_i32_2 : i32
    %7 = arith.ori %3, %6 : i1
    %c0 = arith.constant 0 : index
    %c0_3 = arith.constant 0 : index
    %c0_4 = arith.constant 0 : index
    %8 = vector.load %arg2[%c0, %c0_3, %c0_4] : memref<1x8x256xf32, #tpu.memory_space<vmem>>, vector<1x8x256xf32>
    %9 = vector.shape_cast %8 : vector<1x8x256xf32> to vector<8x256xf32>
    %c0_5 = arith.constant 0 : index
    %c0_6 = arith.constant 0 : index
    %10 = vector.load %arg13[%c0_5, %c0_6] : memref<8x256xf32, #tpu.memory_space<vmem>>, vector<8x256xf32>
    %11 = arith.select %7, %9, %10 : vector<8x256xf32>
    %c0_7 = arith.constant 0 : index
    %c0_8 = arith.constant 0 : index
    %12 = vector.load %arg5[%c0_7, %c0_8] : memref<256x128xf32, #tpu.memory_space<vmem>>, vector<256x128xf32>
    %cst = arith.constant dense<0.000000e+00> : vector<8x128xf32>
    %13 = tpu.matmul %11, %12, %cst {dimension_numbers = #tpu.dot_dimension_numbers<[1], [0], [0], [1], [0, 0, 1, 1], [], []>} : vector<8x256xf32>, vector<256x128xf32>, vector<8x128xf32> -> vector<8x128xf32>
    %c0_9 = arith.constant 0 : index
    %c0_10 = arith.constant 0 : index
    %14 = vector.load %arg11[%c0_9, %c0_10] : memref<8x128xf32, #tpu.memory_space<vmem>>, vector<8x128xf32>
    %15 = tpu.concatenate %13, %14 in 1 : vector<8x128xf32>, vector<8x128xf32> -> vector<8x256xf32>
    %c0_11 = arith.constant 0 : index
    %c0_12 = arith.constant 0 : index
    %16 = vector.load %arg12[%c0_11, %c0_12] : memref<8x128xf32, #tpu.memory_space<vmem>>, vector<8x128xf32>
    %c0_13 = arith.constant 0 : index
    %c0_14 = arith.constant 0 : index
    %17 = vector.load %arg6[%c0_13, %c0_14] : memref<256x512xf32, #tpu.memory_space<vmem>>, vector<256x512xf32>
    %c0_15 = arith.constant 0 : index
    %c0_16 = arith.constant 0 : index
    %18 = vector.load %arg7[%c0_15, %c0_16] : memref<1x512xf32, #tpu.memory_space<vmem>>, vector<1x512xf32>
    %cst_17 = arith.constant dense<0.000000e+00> : vector<8x512xf32>
    %19 = tpu.matmul %15, %17, %cst_17 {dimension_numbers = #tpu.dot_dimension_numbers<[1], [0], [0], [1], [0, 0, 1, 1], [], []>} : vector<8x256xf32>, vector<256x512xf32>, vector<8x512xf32> -> vector<8x512xf32>
    %20 = vector.broadcast %18 : vector<1x512xf32> to vector<8x512xf32>
    %21 = arith.addf %19, %20 : vector<8x512xf32>
    %22 = vector.extract_strided_slice %21 {offsets = [0, 0], sizes = [8, 128], strides = [1, 1]} : vector<8x512xf32> to vector<8x128xf32>
    %23 = arith.negf %22 : vector<8x128xf32>
    %24 = math.exp %23 : vector<8x128xf32>
    %cst_18 = arith.constant 1.000000e+00 : f32
    %25 = vector.broadcast %cst_18 : f32 to vector<8x128xf32>
    %26 = arith.addf %25, %24 : vector<8x128xf32>
    %27 = arith.divf %25, %26 : vector<8x128xf32>
    %28 = vector.extract_strided_slice %21 {offsets = [0, 128], sizes = [8, 128], strides = [1, 1]} : vector<8x512xf32> to vector<8x128xf32>
    %29 = arith.negf %28 : vector<8x128xf32>
    %30 = math.exp %29 : vector<8x128xf32>
    %cst_19 = arith.constant 1.000000e+00 : f32
    %31 = vector.broadcast %cst_19 : f32 to vector<8x128xf32>
    %32 = arith.addf %31, %30 : vector<8x128xf32>
    %33 = arith.divf %31, %32 : vector<8x128xf32>
    %34 = vector.extract_strided_slice %21 {offsets = [0, 256], sizes = [8, 128], strides = [1, 1]} : vector<8x512xf32> to vector<8x128xf32>
    %35 = math.tanh %34 : vector<8x128xf32>
    %36 = vector.extract_strided_slice %21 {offsets = [0, 384], sizes = [8, 128], strides = [1, 1]} : vector<8x512xf32> to vector<8x128xf32>
    %37 = arith.negf %36 : vector<8x128xf32>
    %38 = math.exp %37 : vector<8x128xf32>
    %cst_20 = arith.constant 1.000000e+00 : f32
    %39 = vector.broadcast %cst_20 : f32 to vector<8x128xf32>
    %40 = arith.addf %39, %38 : vector<8x128xf32>
    %41 = arith.divf %39, %40 : vector<8x128xf32>
    %42 = arith.mulf %33, %16 : vector<8x128xf32>
    %43 = arith.mulf %27, %35 : vector<8x128xf32>
    %44 = arith.addf %42, %43 : vector<8x128xf32>
    %45 = math.tanh %44 : vector<8x128xf32>
    %46 = arith.mulf %41, %45 : vector<8x128xf32>
    %c0_21 = arith.constant 0 : index
    %c0_22 = arith.constant 0 : index
    %47 = vector.load %arg11[%c0_21, %c0_22] : memref<8x128xf32, #tpu.memory_space<vmem>>, vector<8x128xf32>
    tpu.vector_store %arg11[%c0_21, %c0_22], %46 {strides = array<i32>} : memref<8x128xf32, #tpu.memory_space<vmem>>, vector<8x128xf32>,
    %c0_23 = arith.constant 0 : index
    %c0_24 = arith.constant 0 : index
    %48 = vector.load %arg12[%c0_23, %c0_24] : memref<8x128xf32, #tpu.memory_space<vmem>>, vector<8x128xf32>
    tpu.vector_store %arg12[%c0_23, %c0_24], %44 {strides = array<i32>} : memref<8x128xf32, #tpu.memory_space<vmem>>, vector<8x128xf32>,
    %c0_25 = arith.constant 0 : index
    %c0_26 = arith.constant 0 : index
    %49 = vector.load %arg8[%c0_25, %c0_26] : memref<128x256xf32, #tpu.memory_space<vmem>>, vector<128x256xf32>
    %cst_27 = arith.constant dense<0.000000e+00> : vector<8x256xf32>
    %50 = tpu.matmul %46, %49, %cst_27 {dimension_numbers = #tpu.dot_dimension_numbers<[1], [0], [0], [1], [0, 0, 1, 1], [], []>} : vector<8x128xf32>, vector<128x256xf32>, vector<8x256xf32> -> vector<8x256xf32>
    %c0_28 = arith.constant 0 : index
    %c0_29 = arith.constant 0 : index
    %51 = vector.load %arg9[%c0_28, %c0_29] : memref<1x256xf32, #tpu.memory_space<vmem>>, vector<1x256xf32>
    %52 = vector.broadcast %51 : vector<1x256xf32> to vector<8x256xf32>
    %53 = arith.addf %50, %52 : vector<8x256xf32>
    %c0_30 = arith.constant 0 : index
    %c0_31 = arith.constant 0 : index
    %c0_32 = arith.constant 0 : index
    %54 = vector.load %arg10[%c0_30, %c0_31, %c0_32] : memref<1x8x256xf32, #tpu.memory_space<vmem>>, vector<1x8x256xf32>
    %55 = vector.shape_cast %54 : vector<1x8x256xf32> to vector<8x256xf32>
    %56 = vector.shape_cast %53 : vector<8x256xf32> to vector<1x8x256xf32>
    tpu.vector_store %arg10[%c0_30, %c0_31, %c0_32], %56 {strides = array<i32>} : memref<1x8x256xf32, #tpu.memory_space<vmem>>, vector<1x8x256xf32>,
    %57 = tpu.iota {dimensions = array<i32: 1>} : vector<8x256xi32>
    %cst_33 = arith.constant dense<0xFF800000> : vector<8xf32>
    %58 = vector.multi_reduction <maximumf>, %53, %cst_33 [1] : vector<8x256xf32> to vector<8xf32>
    %59 = vector.shape_cast %58 : vector<8xf32> to vector<8x1xf32>
    %60 = vector.broadcast %59 : vector<8x1xf32> to vector<8x256xf32>
    %61 = arith.cmpf oeq, %53, %60 : vector<8x256xf32>
    %c256_i32 = arith.constant 256 : i32
    %62 = vector.broadcast %c256_i32 : i32 to vector<8x256xi32>
    %63 = arith.select %61, %57, %62 : vector<8x256xi1>, vector<8x256xi32>
    %cst_34 = arith.constant dense<2147483647> : vector<8xi32>
    %64 = vector.multi_reduction <minsi>, %63, %cst_34 [1] : vector<8x256xi32> to vector<8xi32>
    %65 = vector.shape_cast %64 : vector<8xi32> to vector<8x1xi32>
    %66 = vector.broadcast %65 : vector<8x1xi32> to vector<8x256xi32>
    %67 = arith.cmpi eq, %57, %66 : vector<8x256xi32>
    %68 = arith.extui %67 : vector<8x256xi1> to vector<8x256xi32>
    %69 = arith.sitofp %68 : vector<8x256xi32> to vector<8x256xf32>
    %c0_35 = arith.constant 0 : index
    %c0_36 = arith.constant 0 : index
    %70 = vector.load %arg13[%c0_35, %c0_36] : memref<8x256xf32, #tpu.memory_space<vmem>>, vector<8x256xf32>
    tpu.vector_store %arg13[%c0_35, %c0_36], %69 {strides = array<i32>} : memref<8x256xf32, #tpu.memory_space<vmem>>, vector<8x256xf32>,
    return
  }
  func.func @transform_0(%arg0: i32, %arg1: memref<8xi32, #tpu.memory_space<smem>>) -> (i32, i32, i32) {
    %c0_i32 = arith.constant 0 : i32
    %c0_i32_0 = arith.constant 0 : i32
    %c0_i32_1 = arith.constant 0 : i32
    return %arg0, %c0_i32, %c0_i32_0 : i32, i32, i32
  }
  func.func @transform_1(%arg0: i32, %arg1: memref<8xi32, #tpu.memory_space<smem>>) -> (i32, i32) {
    %c0_i32 = arith.constant 0 : i32
    %c0_i32_0 = arith.constant 0 : i32
    %c0_i32_1 = arith.constant 0 : i32
    return %c0_i32, %c0_i32_0 : i32, i32
  }
  func.func @transform_2(%arg0: i32, %arg1: memref<8xi32, #tpu.memory_space<smem>>) -> (i32, i32) {
    %c0_i32 = arith.constant 0 : i32
    %c0_i32_0 = arith.constant 0 : i32
    %c0_i32_1 = arith.constant 0 : i32
    return %c0_i32, %c0_i32_0 : i32, i32
  }
  func.func @transform_3(%arg0: i32, %arg1: memref<8xi32, #tpu.memory_space<smem>>) -> (i32, i32) {
    %c0_i32 = arith.constant 0 : i32
    %c0_i32_0 = arith.constant 0 : i32
    %c0_i32_1 = arith.constant 0 : i32
    return %c0_i32, %c0_i32_0 : i32, i32
  }
  func.func @transform_4(%arg0: i32, %arg1: memref<8xi32, #tpu.memory_space<smem>>) -> (i32, i32) {
    %c0_i32 = arith.constant 0 : i32
    %c0_i32_0 = arith.constant 0 : i32
    %c0_i32_1 = arith.constant 0 : i32
    return %c0_i32, %c0_i32_0 : i32, i32
  }
  func.func @transform_5(%arg0: i32, %arg1: memref<8xi32, #tpu.memory_space<smem>>) -> (i32, i32) {
    %c0_i32 = arith.constant 0 : i32
    %c0_i32_0 = arith.constant 0 : i32
    %c0_i32_1 = arith.constant 0 : i32
    return %c0_i32, %c0_i32_0 : i32, i32
  }
  func.func @transform_6(%arg0: i32, %arg1: memref<8xi32, #tpu.memory_space<smem>>) -> (i32, i32) {
    %c0_i32 = arith.constant 0 : i32
    %c0_i32_0 = arith.constant 0 : i32
    %c0_i32_1 = arith.constant 0 : i32
    return %c0_i32, %c0_i32_0 : i32, i32
  }
  func.func @transform_7(%arg0: i32, %arg1: memref<8xi32, #tpu.memory_space<smem>>) -> (i32, i32) {
    %c0_i32 = arith.constant 0 : i32
    %c0_i32_0 = arith.constant 0 : i32
    %c0_i32_1 = arith.constant 0 : i32
    return %c0_i32, %c0_i32_0 : i32, i32
  }
  func.func @transform_8(%arg0: i32, %arg1: memref<8xi32, #tpu.memory_space<smem>>) -> (i32, i32, i32) {
    %c0_i32 = arith.constant 0 : i32
    %c0_i32_0 = arith.constant 0 : i32
    %c0_i32_1 = arith.constant 0 : i32
    return %arg0, %c0_i32, %c0_i32_0 : i32, i32, i32
  }
}

</mosaic_0001>

<llo_original>
// kernel: seq2seq_forward.3
$region0: #{seq2seq_forward.3}
  #allocation0 [shape = 'u32[]', space=smem, size = 0x4, offset = 0x4, fixed_abs, tag = 'smem constant byte address 0x4 - core index']
  #allocation1 [shape = 'u32[72,128]{1,0:T(1,128)}', space=vmem, size = 0x9000, scoped, tag = 'internal scratch']
  #allocation2 [shape = 'f32[8,128]{1,0:T(8,128)}', space=vmem, size = 0x1000, scoped, tag = 'scratch operand']
  #allocation3 [shape = 'f32[8,128]{1,0:T(8,128)}', space=vmem, size = 0x1000, scoped, tag = 'scratch operand']
  #allocation4 [shape = 'f32[8,256]{1,0:T(8,128)}', space=vmem, size = 0x2000, scoped, tag = 'scratch operand']
  #allocation5 [shape = 's32[1]{0}', space=sflag, size = 0x4, scoped, tag = 'scoped memory for seq2seq_forward.3']
  #allocation6 [shape = 'u8[512]{0}', space=smem, size = 0x200, scoped, tag = 'prefetched SMEM operand 0']
  %s0 = inlined_call_operand.vmem [shape: s32[8], index: 0, kind: input, shape index: {}]
  %s1 = inlined_call_operand.vmem [shape: f32[8,8,256], index: 1, kind: input, shape index: {}]
  %s2 = inlined_call_operand.vmem [shape: f32[8,128], index: 2, kind: input, shape index: {}]
  %s3 = inlined_call_operand.vmem [shape: f32[8,128], index: 3, kind: input, shape index: {}]
  %s4 = inlined_call_operand.vmem [shape: f32[256,128], index: 4, kind: input, shape index: {}]
  %s5 = inlined_call_operand.hbm [shape: f32[256,512], index: 5, kind: input, shape index: {}]
  %s6 = inlined_call_operand.vmem [shape: f32[1,512], index: 6, kind: input, shape index: {}]
  %s7 = inlined_call_operand.vmem [shape: f32[128,256], index: 7, kind: input, shape index: {}]
  %s8 = inlined_call_operand.vmem [shape: f32[1,256], index: 8, kind: input, shape index: {}]
  %s9 = inlined_call_operand.vmem [shape: f32[7,8,256], index: 9, kind: output, shape index: {}]
  %s10 = sld [smem:[#allocation0]]
  $region73: #{seq2seq_forward.3} parent=0
    _
  %s12 = ssub.s32 1, %s10
  %s13 = scalar_select 0, %s12, %s10
  %s15 = sshll.u32 %s0, 4
  %s16 = int_to_ptr.vmem [resolvable:$true] %s15
  %18 = dma.vmem_to_smem %s16, 16, [#allocation6], [#allocation5]
  %20 = dma.done [#allocation5], 16
  %21 = sfence
  $region1: #{seq2seq_forward.3} parent=0
    #allocation7 [shape = 'u8[524288]{0}', space=vmem, size = 0x80000, scoped, tag = 'input window, operand 5, single buffered']
    #allocation8 [shape = 's32[2]{0}', space=sflag, size = 0x8, scoped, tag = 'scoped memory for seq2seq_forward.3']
    %22 = vsyncpa [#allocation8], 0
    loop: start=0, step=1, limit=9
    $region2: #{seq2seq_forward.3} parent=1 // loop_pre_header
      _
    $region3: #{seq2seq_forward.3} parent=1 // loop_header
      %s24 = sphi 0, %s28
      %p25 = scmp.ge.s32.totalorder %s24, 9
      %s34 = sphi 0, %s36
      %s37 = sphi 0, %s34
      %s38 = sphi 0, %s37
      %s54 = sphi 0, %s38
      %s58 = sphi 0, %s58
      %s60 = sphi 0, %s58
      %s61 = sphi 0, %s60
      %s75 = sphi 0, %s61
      %s79 = sphi 0, %s79
      %s81 = sphi 0, %s79
      %s82 = sphi 0, %s81
      %s96 = sphi 0, %s82
      %s100 = sphi 0, %s100
      %s102 = sphi 0, %s100
      %s103 = sphi 0, %s102
      %s117 = sphi 0, %s103
      %s121 = sphi 0, %s121
      %s123 = sphi 0, %s121
      %s124 = sphi 0, %s123
      %s138 = sphi 0, %s124
      %s142 = sphi 0, %s142
      %s144 = sphi 0, %s142
      %s145 = sphi 0, %s144
      %s159 = sphi 0, %s145
      %s163 = sphi 0, %s163
      %s165 = sphi 0, %s163
      %s166 = sphi 0, %s165
      %s180 = sphi 0, %s166
      %s184 = sphi 0, %s184
      %s186 = sphi 0, %s184
      %s187 = sphi 0, %s186
      %s201 = sphi 0, %s187
      %s207 = sphi 0, %s209
      %s210 = sphi 0, %s207
      %s211 = sphi 0, %s210
      %s227 = sphi 0, %s211
    $region4: #{seq2seq_forward.3} parent=1 // loop_header_branch
      %27 = sbr.rel (%p25) target = $region8
    $region5: #{seq2seq_forward.3} parent=1 // loop_body
      %s29 = ssub.s32 %s24, 1
      %s30 = ssub.s32 %s24, 2
      %s31 = sadd.s32 %s24, 1
      %s32 = ssub.s32 %s24, %s31
      %p33 = scmp.eq.s32.totalorder %s32, 0
      %s35 = sadd.s32 %s34, 1
      %s36 = scalar_select %p33, %s34, %s35
      %p39 = pneg %p33
      %p40 = scmp.eq.s32.totalorder %s24, 6
      %p41 = por %p39, %p40
      %p42 = scmp.ne.s32.totalorder %s34, %s37
      %p43 = scmp.eq.s32.totalorder %s24, 0
      %p44 = por %p42, %p43
      %p45 = scmp.ne.s32.totalorder %s34, %s37
      %p46 = scmp.eq.s32.totalorder %s29, 6
      %p47 = por %p45, %p46
      %p48 = scmp.ne.s32.totalorder %s37, %s38
      %p49 = scmp.eq.s32.totalorder %s29, 0
      %p50 = por %p48, %p49
      %p51 = scmp.ne.s32.totalorder %s37, %s38
      %p52 = scmp.eq.s32.totalorder %s30, 6
      %p53 = por %p51, %p52
      %p55 = scmp.ne.s32.totalorder %s38, %s54
      %p56 = scmp.eq.s32.totalorder %s30, 0
      %p57 = por %p55, %p56
      %s59 = sadd.s32 %s58, 1
      %p62 = scmp.eq.s32.totalorder %s24, 6
      %p63 = scmp.ne.s32.totalorder %s58, %s60
      %p64 = scmp.eq.s32.totalorder %s24, 0
      %p65 = por %p63, %p64
      %p66 = scmp.ne.s32.totalorder %s58, %s60
      %p67 = scmp.eq.s32.totalorder %s29, 6
      %p68 = por %p66, %p67
      %p69 = scmp.ne.s32.totalorder %s60, %s61
      %p70 = scmp.eq.s32.totalorder %s29, 0
      %p71 = por %p69, %p70
      %p72 = scmp.ne.s32.totalorder %s60, %s61
      %p73 = scmp.eq.s32.totalorder %s30, 6
      %p74 = por %p72, %p73
      %p76 = scmp.ne.s32.totalorder %s61, %s75
      %p77 = scmp.eq.s32.totalorder %s30, 0
      %p78 = por %p76, %p77
      %s80 = sadd.s32 %s79, 1
      %p83 = scmp.eq.s32.totalorder %s24, 6
      %p84 = scmp.ne.s32.totalorder %s79, %s81
      %p85 = scmp.eq.s32.totalorder %s24, 0
      %p86 = por %p84, %p85
      %p87 = scmp.ne.s32.totalorder %s79, %s81
      %p88 = scmp.eq.s32.totalorder %s29, 6
      %p89 = por %p87, %p88
      %p90 = scmp.ne.s32.totalorder %s81, %s82
      %p91 = scmp.eq.s32.totalorder %s29, 0
      %p92 = por %p90, %p91
      %p93 = scmp.ne.s32.totalorder %s81, %s82
      %p94 = scmp.eq.s32.totalorder %s30, 6
      %p95 = por %p93, %p94
      %p97 = scmp.ne.s32.totalorder %s82, %s96
      %p98 = scmp.eq.s32.totalorder %s30, 0
      %p99 = por %p97, %p98
      %s101 = sadd.s32 %s100, 1
      %p104 = scmp.eq.s32.totalorder %s24, 6
      %p105 = scmp.ne.s32.totalorder %s100, %s102
      %p106 = scmp.eq.s32.totalorder %s24, 0
      %p107 = por %p105, %p106
      %p108 = scmp.ne.s32.totalorder %s100, %s102
      %p109 = scmp.eq.s32.totalorder %s29, 6
      %p110 = por %p108, %p109
      %p111 = scmp.ne.s32.totalorder %s102, %s103
      %p112 = scmp.eq.s32.totalorder %s29, 0
      %p113 = por %p111, %p112
      %p114 = scmp.ne.s32.totalorder %s102, %s103
      %p115 = scmp.eq.s32.totalorder %s30, 6
      %p116 = por %p114, %p115
      %p118 = scmp.ne.s32.totalorder %s103, %s117
      %p119 = scmp.eq.s32.totalorder %s30, 0
      %p120 = por %p118, %p119
      %s122 = sadd.s32 %s121, 1
      %p125 = scmp.eq.s32.totalorder %s24, 6
      %p126 = scmp.ne.s32.totalorder %s121, %s123
      %p127 = scmp.eq.s32.totalorder %s24, 0
      %p128 = por %p126, %p127
      %p129 = scmp.ne.s32.totalorder %s121, %s123
      %p130 = scmp.eq.s32.totalorder %s29, 6
      %p131 = por %p129, %p130
      %p132 = scmp.ne.s32.totalorder %s123, %s124
      %p133 = scmp.eq.s32.totalorder %s29, 0
      %p134 = por %p132, %p133
      %p135 = scmp.ne.s32.totalorder %s123, %s124
      %p136 = scmp.eq.s32.totalorder %s30, 6
      %p137 = por %p135, %p136
      %p139 = scmp.ne.s32.totalorder %s124, %s138
      %p140 = scmp.eq.s32.totalorder %s30, 0
      %p141 = por %p139, %p140
      %s143 = sadd.s32 %s142, 1
      %p146 = scmp.eq.s32.totalorder %s24, 6
      %p147 = scmp.ne.s32.totalorder %s142, %s144
      %p148 = scmp.eq.s32.totalorder %s24, 0
      %p149 = por %p147, %p148
      %p150 = scmp.ne.s32.totalorder %s142, %s144
      %p151 = scmp.eq.s32.totalorder %s29, 6
      %p152 = por %p150, %p151
      %p153 = scmp.ne.s32.totalorder %s144, %s145
      %p154 = scmp.eq.s32.totalorder %s29, 0
      %p155 = por %p153, %p154
      %p156 = scmp.ne.s32.totalorder %s144, %s145
      %p157 = scmp.eq.s32.totalorder %s30, 6
      %p158 = por %p156, %p157
      %p160 = scmp.ne.s32.totalorder %s145, %s159
      %p161 = scmp.eq.s32.totalorder %s30, 0
      %p162 = por %p160, %p161
      %s164 = sadd.s32 %s163, 1
      %p167 = scmp.eq.s32.totalorder %s24, 6
      %p168 = scmp.ne.s32.totalorder %s163, %s165
      %p169 = scmp.eq.s32.totalorder %s24, 0
      %p170 = por %p168, %p169
      %p171 = scmp.ne.s32.totalorder %s163, %s165
      %p172 = scmp.eq.s32.totalorder %s29, 6
      %p173 = por %p171, %p172
      %p174 = scmp.ne.s32.totalorder %s165, %s166
      %p175 = scmp.eq.s32.totalorder %s29, 0
      %p176 = por %p174, %p175
      %p177 = scmp.ne.s32.totalorder %s165, %s166
      %p178 = scmp.eq.s32.totalorder %s30, 6
      %p179 = por %p177, %p178
      %p181 = scmp.ne.s32.totalorder %s166, %s180
      %p182 = scmp.eq.s32.totalorder %s30, 0
      %p183 = por %p181, %p182
      %s185 = sadd.s32 %s184, 1
      %p188 = scmp.eq.s32.totalorder %s24, 6
      %p189 = scmp.ne.s32.totalorder %s184, %s186
      %p190 = scmp.eq.s32.totalorder %s24, 0
      %p191 = por %p189, %p190
      %p192 = scmp.ne.s32.totalorder %s184, %s186
      %p193 = scmp.eq.s32.totalorder %s29, 6
      %p194 = por %p192, %p193
      %p195 = scmp.ne.s32.totalorder %s186, %s187
      %p196 = scmp.eq.s32.totalorder %s29, 0
      %p197 = por %p195, %p196
      %p198 = scmp.ne.s32.totalorder %s186, %s187
      %p199 = scmp.eq.s32.totalorder %s30, 6
      %p200 = por %p198, %p199
      %p202 = scmp.ne.s32.totalorder %s187, %s201
      %p203 = scmp.eq.s32.totalorder %s30, 0
      %p204 = por %p202, %p203
      %s205 = ssub.s32 %s24, %s31
      %p206 = scmp.eq.s32.totalorder %s205, 0
      %s208 = sadd.s32 %s207, 1
      %s209 = scalar_select %p206, %s207, %s208
      %p212 = pneg %p206
      %p213 = scmp.eq.s32.totalorder %s24, 6
      %p214 = por %p212, %p213
      %p215 = scmp.ne.s32.totalorder %s207, %s210
      %p216 = scmp.eq.s32.totalorder %s24, 0
      %p217 = por %p215, %p216
      %p218 = scmp.ne.s32.totalorder %s207, %s210
      %p219 = scmp.eq.s32.totalorder %s29, 6
      %p220 = por %p218, %p219
      %p221 = scmp.ne.s32.totalorder %s210, %s211
      %p222 = scmp.eq.s32.totalorder %s29, 0
      %p223 = por %p221, %p222
      %p224 = scmp.ne.s32.totalorder %s210, %s211
      %p225 = scmp.eq.s32.totalorder %s30, 6
      %p226 = por %p224, %p225
      %p228 = scmp.ne.s32.totalorder %s211, %s227
      %p229 = scmp.eq.s32.totalorder %s30, 0
      %p230 = por %p228, %p229
      %p231 = scmp.le.s32.totalorder 1, %s24
      %p232 = scmp.lt.s32.totalorder %s24, 8
      %p233 = pnand %p231, %p232
      %p234 = pneg %p233
      // Predicated region
      $region9: #{seq2seq_forward.3} parent=5 // pred_check
        _
      $region10: #{seq2seq_forward.3} parent=5 // pred_check_branch
        %236 = sbr.rel (%p233) target = $region12
      $region11: #{seq2seq_forward.3} parent=5 // pred_region
        %s237 = ssub.s32 %s24, 1
        // Predicated region
        $region13: #{seq2seq_forward.3} parent=11 // pred_check
          %p238 = pneg %p71
        $region14: #{seq2seq_forward.3} parent=11 // pred_check_branch
          %240 = sbr.rel (%p238) target = $region16
        $region15: #{seq2seq_forward.3} parent=11 // pred_region
          _
        $region16: #{seq2seq_forward.3} parent=11 // pred_fallthru
          _
        // Predicated region
        $region17: #{seq2seq_forward.3} parent=11 // pred_check
          %p241 = pneg %p92
        $region18: #{seq2seq_forward.3} parent=11 // pred_check_branch
          %243 = sbr.rel (%p241) target = $region20
        $region19: #{seq2seq_forward.3} parent=11 // pred_region
          _
        $region20: #{seq2seq_forward.3} parent=11 // pred_fallthru
          _
        // Predicated region
        $region21: #{seq2seq_forward.3} parent=11 // pred_check
          %p244 = pneg %p113
        $region22: #{seq2seq_forward.3} parent=11 // pred_check_branch
          %246 = sbr.rel (%p244) target = $region24
        $region23: #{seq2seq_forward.3} parent=11 // pred_region
          _
        $region24: #{seq2seq_forward.3} parent=11 // pred_fallthru
          _
        // Predicated region
        $region25: #{seq2seq_forward.3} parent=11 // pred_check
          %p247 = pneg %p134
        $region26: #{seq2seq_forward.3} parent=11 // pred_check_branch
          %249 = sbr.rel (%p247) target = $region28
        $region27: #{seq2seq_forward.3} parent=11 // pred_region
          %251 = vsyncadd [#allocation8], 0
          %s252 = sshll.u32 %s5, 4
          %s253 = int_to_ptr.hbm [resolvable:$true] %s252
          %s254 = sshll.u32 [#allocation7], 4
          %s255 = int_to_ptr.vmem [resolvable:$true] %s254
          %260 = dma.hbm_to_vmem [thread:$0]  %s253, 16384, %s255, [#allocation8], 512, 512, 32
        $region28: #{seq2seq_forward.3} parent=11 // pred_fallthru
          _
        // Predicated region
        $region29: #{seq2seq_forward.3} parent=11 // pred_check
          %p261 = pneg %p155
        $region30: #{seq2seq_forward.3} parent=11 // pred_check_branch
          %263 = sbr.rel (%p261) target = $region32
        $region31: #{seq2seq_forward.3} parent=11 // pred_region
          _
        $region32: #{seq2seq_forward.3} parent=11 // pred_fallthru
          _
        // Predicated region
        $region33: #{seq2seq_forward.3} parent=11 // pred_check
          %p264 = pneg %p176
        $region34: #{seq2seq_forward.3} parent=11 // pred_check_branch
          %266 = sbr.rel (%p264) target = $region36
        $region35: #{seq2seq_forward.3} parent=11 // pred_region
          _
        $region36: #{seq2seq_forward.3} parent=11 // pred_fallthru
          _
        // Predicated region
        $region37: #{seq2seq_forward.3} parent=11 // pred_check
          %p267 = pneg %p197
        $region38: #{seq2seq_forward.3} parent=11 // pred_check_branch
          %269 = sbr.rel (%p267) target = $region40
        $region39: #{seq2seq_forward.3} parent=11 // pred_region
          _
        $region40: #{seq2seq_forward.3} parent=11 // pred_fallthru
          _
      $region12: #{seq2seq_forward.3} parent=5 // pred_fallthru
        _
      %p270 = scmp.lt.s32.totalorder %s24, 7
      // Predicated region
      $region41: #{seq2seq_forward.3} parent=5 // pred_check
        %p271 = pneg %p270
      $region42: #{seq2seq_forward.3} parent=5 // pred_check_branch
        %273 = sbr.rel (%p271) target = $region44
      $region43: #{seq2seq_forward.3} parent=5 // pred_region
        // Predicated region
        $region45: #{seq2seq_forward.3} parent=43 // pred_check
          %p274 = pneg %p44
        $region46: #{seq2seq_forward.3} parent=43 // pred_check_branch
          %276 = sbr.rel (%p274) target = $region48
        $region47: #{seq2seq_forward.3} parent=43 // pred_region
          %p277 = scmp.lt.s32.totalorder %s24, 7
          %s278 = scalar_select %p277, %s24, 7
          %s279 = smul.addr %s278, 2
          %s280 = smul.addr %s279, 8
          %s281 = scalar_lea.vmem %s1, %s280
        $region48: #{seq2seq_forward.3} parent=43 // pred_fallthru
          _
      $region44: #{seq2seq_forward.3} parent=5 // pred_fallthru
        _
      %p282 = scmp.le.s32.totalorder 1, %s24
      %p283 = scmp.lt.s32.totalorder %s24, 8
      %p284 = pnand %p282, %p283
      %p285 = pneg %p284
      // Predicated region
      $region49: #{seq2seq_forward.3} parent=5 // pred_check
        _
      $region50: #{seq2seq_forward.3} parent=5 // pred_check_branch
        %287 = sbr.rel (%p284) target = $region52
      $region51: #{seq2seq_forward.3} parent=5 // pred_region
        %s288 = ssub.s32 %s24, 1
        // Predicated region
        $region53: #{seq2seq_forward.3} parent=51 // pred_check
          %p289 = pneg %p134
        $region54: #{seq2seq_forward.3} parent=51 // pred_check_branch
          %291 = sbr.rel (%p289) target = $region56
        $region55: #{seq2seq_forward.3} parent=51 // pred_region
          %293 = dma.done [#allocation8], 16384
        $region56: #{seq2seq_forward.3} parent=51 // pred_fallthru
          _
        %p294 = scmp.lt.s32.totalorder %s29, 7
        %s295 = scalar_select %p294, %s29, 7
        %s296 = smul.addr %s295, 2
        %s297 = smul.addr %s296, 8
        %s298 = scalar_lea.vmem %s1, %s297
        %p299 = pneg %p50
        %p300 = pneg %p47
        %p301 = pneg %p71
        %p302 = pneg %p68
        %p303 = pneg %p92
        %p304 = pneg %p89
        %p305 = pneg %p113
        %p306 = pneg %p110
        %p307 = pneg %p134
        %p308 = pneg %p131
        %p309 = pneg %p155
        %p310 = pneg %p152
        %p311 = pneg %p176
        %p312 = pneg %p173
        %p313 = pneg %p197
        %p314 = pneg %p194
        %p315 = pneg %p223
        %p316 = pneg %p220
        %p317 = scmp.lt.s32.totalorder %s29, 6
        %s318 = scalar_select %p317, %s29, 6
        %s319 = smul.addr %s318, 2
        %s320 = smul.addr %s319, 8
        %s321 = scalar_lea.vmem %s9, %s320
        %p322 = scmp.lt.s32.totalorder %s29, 7
        %s323 = scalar_select %p322, %s29, 7
        %s324 = smul.addr %s323, 2
        %s325 = smul.addr %s324, 8
        %s326 = scalar_lea.vmem %s1, %s325
        %p327 = scmp.lt.s32.totalorder %s29, 6
        %s328 = scalar_select %p327, %s29, 6
        %s329 = smul.addr %s328, 2
        %s330 = smul.addr %s329, 8
        %s331 = scalar_lea.vmem %s9, %s330
        %p332 = scmp.eq.s32.totalorder %s29, 0
        // Predicated region
        $region57: #{seq2seq_forward.3} parent=51 // pred_check
          %p333 = pneg %p332
        $region58: #{seq2seq_forward.3} parent=51 // pred_check_branch
          %335 = sbr.rel (%p333) target = $region60
        $region59: #{seq2seq_forward.3} parent=51 // pred_region
          %v336 = vld [vmem:[%s2] sm:$0xff]
          %337 = vst [vmem:[#allocation2] sm:$0xff] %v336
          %v338 = vld [vmem:[%s3] sm:$0xff]
          %339 = vst [vmem:[#allocation3] sm:$0xff] %v338
          %340 = vst [vmem:[#allocation4] sm:$0xff] 0.0
          %341 = vst [vmem:[#allocation4 + $0x8] sm:$0xff] 0.0
        $region60: #{seq2seq_forward.3} parent=51 // pred_fallthru
          _
        %s342 = sld [smem:[#allocation6 + %s29]]
        %p343 = scmp.ne.s32.totalorder %s342, 0
        %p344 = por %p332, %p343
        %v345 = vld [vmem:[%s326] sm:$0xff]
        %v346 = vld [vmem:[%s326 + $0x8] sm:$0xff]
        %v347 = vld [vmem:[#allocation4] sm:$0xff]
        %v348 = vld [vmem:[#allocation4 + $0x8] sm:$0xff]
        %s349 = scalar_select %p344, 1, 0
        %v350 = vstv %s349
        %vm351 = vcmp.eq.s32.totalorder %v350, 1
        %v352 = vsel %vm351, %v345, %v347
        %v353 = vsel %vm351, %v346, %v348
        %v354 = vld [vmem:[%s4] sm:$0xff]
        %v355 = vld [vmem:[%s4 + $0x8] sm:$0xff]
        %v356 = vld [vmem:[%s4 + $0x10] sm:$0xff]
        %v357 = vld [vmem:[%s4 + $0x18] sm:$0xff]
        %v358 = vld [vmem:[%s4 + $0x20] sm:$0xff]
        %v359 = vld [vmem:[%s4 + $0x28] sm:$0xff]
        %v360 = vld [vmem:[%s4 + $0x30] sm:$0xff]
        %v361 = vld [vmem:[%s4 + $0x38] sm:$0xff]
        %v362 = vld [vmem:[%s4 + $0x40] sm:$0xff]
        %v363 = vld [vmem:[%s4 + $0x48] sm:$0xff]
        %v364 = vld [vmem:[%s4 + $0x50] sm:$0xff]
        %v365 = vld [vmem:[%s4 + $0x58] sm:$0xff]
        %v366 = vld [vmem:[%s4 + $0x60] sm:$0xff]
        %v367 = vld [vmem:[%s4 + $0x68] sm:$0xff]
        %v368 = vld [vmem:[%s4 + $0x70] sm:$0xff]
        %v369 = vld [vmem:[%s4 + $0x78] sm:$0xff]
        %v370 = vld [vmem:[%s4 + $0x80] sm:$0xff]
        %v371 = vld [vmem:[%s4 + $0x88] sm:$0xff]
        %v372 = vld [vmem:[%s4 + $0x90] sm:$0xff]
        %v373 = vld [vmem:[%s4 + $0x98] sm:$0xff]
        %v374 = vld [vmem:[%s4 + $0xa0] sm:$0xff]
        %v375 = vld [vmem:[%s4 + $0xa8] sm:$0xff]
        %v376 = vld [vmem:[%s4 + $0xb0] sm:$0xff]
        %v377 = vld [vmem:[%s4 + $0xb8] sm:$0xff]
        %v378 = vld [vmem:[%s4 + $0xc0] sm:$0xff]
        %v379 = vld [vmem:[%s4 + $0xc8] sm:$0xff]
        %v380 = vld [vmem:[%s4 + $0xd0] sm:$0xff]
        %v381 = vld [vmem:[%s4 + $0xd8] sm:$0xff]
        %v382 = vld [vmem:[%s4 + $0xe0] sm:$0xff]
        %v383 = vld [vmem:[%s4 + $0xe8] sm:$0xff]
        %v384 = vld [vmem:[%s4 + $0xf0] sm:$0xff]
        %v385 = vld [vmem:[%s4 + $0xf8] sm:$0xff]
        %386 = vmatpush.msra.mxu0 %v369
        %387 = vmatpush.msra.mxu0 %v368
        %388 = vmatpush.msra.mxu0 %v367
        %389 = vmatpush.msra.mxu0 %v366
        %390 = vmatpush.msra.mxu0 %v365
        %391 = vmatpush.msra.mxu0 %v364
        %392 = vmatpush.msra.mxu0 %v363
        %393 = vmatpush.msra.mxu0 %v362
        %394 = vmatpush.msra.mxu0 %v361
        %395 = vmatpush.msra.mxu0 %v360
        %396 = vmatpush.msra.mxu0 %v359
        %397 = vmatpush.msra.mxu0 %v358
        %398 = vmatpush.msra.mxu0 %v357
        %399 = vmatpush.msra.mxu0 %v356
        %400 = vmatpush.msra.mxu0 %v355
        %401 = vmatpush.msra.mxu0 %v354
        %402 = vmatmul.f32.gmra.mxu0 %v352
        %v403 = vpop.f32.mrf.mxu0
        %v404 = vadd.f32 0.0, %v403
        %405 = vdwg.mxu0
        %406 = vmatpush.msra.mxu0 %v385
        %407 = vmatpush.msra.mxu0 %v384
        %408 = vmatpush.msra.mxu0 %v383
        %409 = vmatpush.msra.mxu0 %v382
        %410 = vmatpush.msra.mxu0 %v381
        %411 = vmatpush.msra.mxu0 %v380
        %412 = vmatpush.msra.mxu0 %v379
        %413 = vmatpush.msra.mxu0 %v378
        %414 = vmatpush.msra.mxu0 %v377
        %415 = vmatpush.msra.mxu0 %v376
        %416 = vmatpush.msra.mxu0 %v375
        %417 = vmatpush.msra.mxu0 %v374
        %418 = vmatpush.msra.mxu0 %v373
        %419 = vmatpush.msra.mxu0 %v372
        %420 = vmatpush.msra.mxu0 %v371
        %421 = vmatpush.msra.mxu0 %v370
        %422 = vmatmul.f32.gmra.mxu0 %v353
        %v423 = vpop.f32.mrf.mxu0
        %v424 = vadd.f32 %v404, %v423
        %425 = vdwg.mxu0
        %v426 = vld [vmem:[#allocation2] sm:$0xff]
        %v427 = vld [vmem:[#allocation3] sm:$0xff]
        %v428 = vld [vmem:[#allocation7] sm:$0xff]
        %v429 = vld [vmem:[#allocation7 + $0x8] sm:$0xff]
        %v430 = vld [vmem:[#allocation7 + $0x10] sm:$0xff]
        %v431 = vld [vmem:[#allocation7 + $0x18] sm:$0xff]
        %v432 = vld [vmem:[#allocation7 + $0x20] sm:$0xff]
        %v433 = vld [vmem:[#allocation7 + $0x28] sm:$0xff]
        %v434 = vld [vmem:[#allocation7 + $0x30] sm:$0xff]
        %v435 = vld [vmem:[#allocation7 + $0x38] sm:$0xff]
        %v436 = vld [vmem:[#allocation7 + $0x40] sm:$0xff]
        %v437 = vld [vmem:[#allocation7 + $0x48] sm:$0xff]
        %v438 = vld [vmem:[#allocation7 + $0x50] sm:$0xff]
        %v439 = vld [vmem:[#allocation7 + $0x58] sm:$0xff]
        %v440 = vld [vmem:[#allocation7 + $0x60] sm:$0xff]
        %v441 = vld [vmem:[#allocation7 + $0x68] sm:$0xff]
        %v442 = vld [vmem:[#allocation7 + $0x70] sm:$0xff]
        %v443 = vld [vmem:[#allocation7 + $0x78] sm:$0xff]
        %v444 = vld [vmem:[#allocation7 + $0x80] sm:$0xff]
        %v445 = vld [vmem:[#allocation7 + $0x88] sm:$0xff]
        %v446 = vld [vmem:[#allocation7 + $0x90] sm:$0xff]
        %v447 = vld [vmem:[#allocation7 + $0x98] sm:$0xff]
        %v448 = vld [vmem:[#allocation7 + $0xa0] sm:$0xff]
        %v449 = vld [vmem:[#allocation7 + $0xa8] sm:$0xff]
        %v450 = vld [vmem:[#allocation7 + $0xb0] sm:$0xff]
        %v451 = vld [vmem:[#allocation7 + $0xb8] sm:$0xff]
        %v452 = vld [vmem:[#allocation7 + $0xc0] sm:$0xff]
        %v453 = vld [vmem:[#allocation7 + $0xc8] sm:$0xff]
        %v454 = vld [vmem:[#allocation7 + $0xd0] sm:$0xff]
        %v455 = vld [vmem:[#allocation7 + $0xd8] sm:$0xff]
        %v456 = vld [vmem:[#allocation7 + $0xe0] sm:$0xff]
        %v457 = vld [vmem:[#allocation7 + $0xe8] sm:$0xff]
        %v458 = vld [vmem:[#allocation7 + $0xf0] sm:$0xff]
        %v459 = vld [vmem:[#allocation7 + $0xf8] sm:$0xff]
        %v460 = vld [vmem:[#allocation7 + $0x100] sm:$0xff]
        %v461 = vld [vmem:[#allocation7 + $0x108] sm:$0xff]
        %v462 = vld [vmem:[#allocation7 + $0x110] sm:$0xff]
        %v463 = vld [vmem:[#allocation7 + $0x118] sm:$0xff]
        %v464 = vld [vmem:[#allocation7 + $0x120] sm:$0xff]
        %v465 = vld [vmem:[#allocation7 + $0x128] sm:$0xff]
        %v466 = vld [vmem:[#allocation7 + $0x130] sm:$0xff]
        %v467 = vld [vmem:[#allocation7 + $0x138] sm:$0xff]
        %v468 = vld [vmem:[#allocation7 + $0x140] sm:$0xff]
        %v469 = vld [vmem:[#allocation7 + $0x148] sm:$0xff]
        %v470 = vld [vmem:[#allocation7 + $0x150] sm:$0xff]
        %v471 = vld [vmem:[#allocation7 + $0x158] sm:$0xff]
        %v472 = vld [vmem:[#allocation7 + $0x160] sm:$0xff]
        %v473 = vld [vmem:[#allocation7 + $0x168] sm:$0xff]
        %v474 = vld [vmem:[#allocation7 + $0x170] sm:$0xff]
        %v475 = vld [vmem:[#allocation7 + $0x178] sm:$0xff]
        %v476 = vld [vmem:[#allocation7 + $0x180] sm:$0xff]
        %v477 = vld [vmem:[#allocation7 + $0x188] sm:$0xff]
        %v478 = vld [vmem:[#allocation7 + $0x190] sm:$0xff]
        %v479 = vld [vmem:[#allocation7 + $0x198] sm:$0xff]
        %v480 = vld [vmem:[#allocation7 + $0x1a0] sm:$0xff]
        %v481 = vld [vmem:[#allocation7 + $0x1a8] sm:$0xff]
        %v482 = vld [vmem:[#allocation7 + $0x1b0] sm:$0xff]
        %v483 = vld [vmem:[#allocation7 + $0x1b8] sm:$0xff]
        %v484 = vld [vmem:[#allocation7 + $0x1c0] sm:$0xff]
        %v485 = vld [vmem:[#allocation7 + $0x1c8] sm:$0xff]
        %v486 = vld [vmem:[#allocation7 + $0x1d0] sm:$0xff]
        %v487 = vld [vmem:[#allocation7 + $0x1d8] sm:$0xff]
        %v488 = vld [vmem:[#allocation7 + $0x1e0] sm:$0xff]
        %v489 = vld [vmem:[#allocation7 + $0x1e8] sm:$0xff]
        %v490 = vld [vmem:[#allocation7 + $0x1f0] sm:$0xff]
        %v491 = vld [vmem:[#allocation7 + $0x1f8] sm:$0xff]
        %v492 = vld [vmem:[#allocation7 + $0x200] sm:$0xff]
        %v493 = vld [vmem:[#allocation7 + $0x208] sm:$0xff]
        %v494 = vld [vmem:[#allocation7 + $0x210] sm:$0xff]
        %v495 = vld [vmem:[#allocation7 + $0x218] sm:$0xff]
        %v496 = vld [vmem:[#allocation7 + $0x220] sm:$0xff]
        %v497 = vld [vmem:[#allocation7 + $0x228] sm:$0xff]
        %v498 = vld [vmem:[#allocation7 + $0x230] sm:$0xff]
        %v499 = vld [vmem:[#allocation7 + $0x238] sm:$0xff]
        %v500 = vld [vmem:[#allocation7 + $0x240] sm:$0xff]
        %v501 = vld [vmem:[#allocation7 + $0x248] sm:$0xff]
        %v502 = vld [vmem:[#allocation7 + $0x250] sm:$0xff]
        %v503 = vld [vmem:[#allocation7 + $0x258] sm:$0xff]
        %v504 = vld [vmem:[#allocation7 + $0x260] sm:$0xff]
        %v505 = vld [vmem:[#allocation7 + $0x268] sm:$0xff]
        %v506 = vld [vmem:[#allocation7 + $0x270] sm:$0xff]
        %v507 = vld [vmem:[#allocation7 + $0x278] sm:$0xff]
        %v508 = vld [vmem:[#allocation7 + $0x280] sm:$0xff]
        %v509 = vld [vmem:[#allocation7 + $0x288] sm:$0xff]
        %v510 = vld [vmem:[#allocation7 + $0x290] sm:$0xff]
        %v511 = vld [vmem:[#allocation7 + $0x298] sm:$0xff]
        %v512 = vld [vmem:[#allocation7 + $0x2a0] sm:$0xff]
        %v513 = vld [vmem:[#allocation7 + $0x2a8] sm:$0xff]
        %v514 = vld [vmem:[#allocation7 + $0x2b0] sm:$0xff]
        %v515 = vld [vmem:[#allocation7 + $0x2b8] sm:$0xff]
        %v516 = vld [vmem:[#allocation7 + $0x2c0] sm:$0xff]
        %v517 = vld [vmem:[#allocation7 + $0x2c8] sm:$0xff]
        %v518 = vld [vmem:[#allocation7 + $0x2d0] sm:$0xff]
        %v519 = vld [vmem:[#allocation7 + $0x2d8] sm:$0xff]
        %v520 = vld [vmem:[#allocation7 + $0x2e0] sm:$0xff]
        %v521 = vld [vmem:[#allocation7 + $0x2e8] sm:$0xff]
        %v522 = vld [vmem:[#allocation7 + $0x2f0] sm:$0xff]
        %v523 = vld [vmem:[#allocation7 + $0x2f8] sm:$0xff]
        %v524 = vld [vmem:[#allocation7 + $0x300] sm:$0xff]
        %v525 = vld [vmem:[#allocation7 + $0x308] sm:$0xff]
        %v526 = vld [vmem:[#allocation7 + $0x310] sm:$0xff]
        %v527 = vld [vmem:[#allocation7 + $0x318] sm:$0xff]
        %v528 = vld [vmem:[#allocation7 + $0x320] sm:$0xff]
        %v529 = vld [vmem:[#allocation7 + $0x328] sm:$0xff]
        %v530 = vld [vmem:[#allocation7 + $0x330] sm:$0xff]
        %v531 = vld [vmem:[#allocation7 + $0x338] sm:$0xff]
        %v532 = vld [vmem:[#allocation7 + $0x340] sm:$0xff]
        %v533 = vld [vmem:[#allocation7 + $0x348] sm:$0xff]
        %v534 = vld [vmem:[#allocation7 + $0x350] sm:$0xff]
        %v535 = vld [vmem:[#allocation7 + $0x358] sm:$0xff]
        %v536 = vld [vmem:[#allocation7 + $0x360] sm:$0xff]
        %v537 = vld [vmem:[#allocation7 + $0x368] sm:$0xff]
        %v538 = vld [vmem:[#allocation7 + $0x370] sm:$0xff]
        %v539 = vld [vmem:[#allocation7 + $0x378] sm:$0xff]
        %v540 = vld [vmem:[#allocation7 + $0x380] sm:$0xff]
        %v541 = vld [vmem:[#allocation7 + $0x388] sm:$0xff]
        %v542 = vld [vmem:[#allocation7 + $0x390] sm:$0xff]
        %v543 = vld [vmem:[#allocation7 + $0x398] sm:$0xff]
        %v544 = vld [vmem:[#allocation7 + $0x3a0] sm:$0xff]
        %v545 = vld [vmem:[#allocation7 + $0x3a8] sm:$0xff]
        %v546 = vld [vmem:[#allocation7 + $0x3b0] sm:$0xff]
        %v547 = vld [vmem:[#allocation7 + $0x3b8] sm:$0xff]
        %v548 = vld [vmem:[#allocation7 + $0x3c0] sm:$0xff]
        %v549 = vld [vmem:[#allocation7 + $0x3c8] sm:$0xff]
        %v550 = vld [vmem:[#allocation7 + $0x3d0] sm:$0xff]
        %v551 = vld [vmem:[#allocation7 + $0x3d8] sm:$0xff]
        %v552 = vld [vmem:[#allocation7 + $0x3e0] sm:$0xff]
        %v553 = vld [vmem:[#allocation7 + $0x3e8] sm:$0xff]
        %v554 = vld [vmem:[#allocation7 + $0x3f0] sm:$0xff]
        %v555 = vld [vmem:[#allocation7 + $0x3f8] sm:$0xff]
        %v556 = vld [vmem:[%s6] sm:$0xf]
        %v558 = vperm.slane %v556, 0
        %v559 = vperm.slane %v556, 1
        %v560 = vperm.slane %v556, 2
        %v561 = vperm.slane %v556, 3
        %566 = vmatpush.msra.mxu0 %v488
        %567 = vmatpush.msra.mxu0 %v484
        %568 = vmatpush.msra.mxu0 %v480
        %569 = vmatpush.msra.mxu0 %v476
        %570 = vmatpush.msra.mxu0 %v472
        %571 = vmatpush.msra.mxu0 %v468
        %572 = vmatpush.msra.mxu0 %v464
        %573 = vmatpush.msra.mxu0 %v460
        %574 = vmatpush.msra.mxu0 %v456
        %575 = vmatpush.msra.mxu0 %v452
        %576 = vmatpush.msra.mxu0 %v448
        %577 = vmatpush.msra.mxu0 %v444
        %578 = vmatpush.msra.mxu0 %v440
        %579 = vmatpush.msra.mxu0 %v436
        %580 = vmatpush.msra.mxu0 %v432
        %581 = vmatpush.msra.mxu0 %v428
        %582 = vmatmul.f32.gmra.mxu0 %v424
        %v583 = vpop.f32.mrf.mxu0
        %v584 = vadd.f32 %v558, %v583
        %585 = vdwg.mxu0
        %586 = vmatpush.msra.mxu0 %v552
        %587 = vmatpush.msra.mxu0 %v548
        %588 = vmatpush.msra.mxu0 %v544
        %589 = vmatpush.msra.mxu0 %v540
        %590 = vmatpush.msra.mxu0 %v536
        %591 = vmatpush.msra.mxu0 %v532
        %592 = vmatpush.msra.mxu0 %v528
        %593 = vmatpush.msra.mxu0 %v524
        %594 = vmatpush.msra.mxu0 %v520
        %595 = vmatpush.msra.mxu0 %v516
        %596 = vmatpush.msra.mxu0 %v512
        %597 = vmatpush.msra.mxu0 %v508
        %598 = vmatpush.msra.mxu0 %v504
        %599 = vmatpush.msra.mxu0 %v500
        %600 = vmatpush.msra.mxu0 %v496
        %601 = vmatpush.msra.mxu0 %v492
        %602 = vmatmul.f32.gmra.mxu0 %v426
        %v603 = vpop.f32.mrf.mxu0
        %v604 = vadd.f32 %v584, %v603
        %605 = vdwg.mxu0
        %606 = vmatpush.msra.mxu0 %v489
        %607 = vmatpush.msra.mxu0 %v485
        %608 = vmatpush.msra.mxu0 %v481
        %609 = vmatpush.msra.mxu0 %v477
        %610 = vmatpush.msra.mxu0 %v473
        %611 = vmatpush.msra.mxu0 %v469
        %612 = vmatpush.msra.mxu0 %v465
        %613 = vmatpush.msra.mxu0 %v461
        %614 = vmatpush.msra.mxu0 %v457
        %615 = vmatpush.msra.mxu0 %v453
        %616 = vmatpush.msra.mxu0 %v449
        %617 = vmatpush.msra.mxu0 %v445
        %618 = vmatpush.msra.mxu0 %v441
        %619 = vmatpush.msra.mxu0 %v437
        %620 = vmatpush.msra.mxu0 %v433
        %621 = vmatpush.msra.mxu0 %v429
        %622 = vmatmul.f32.gmra.mxu0 %v424
        %v623 = vpop.f32.mrf.mxu0
        %v624 = vadd.f32 %v559, %v623
        %625 = vdwg.mxu0
        %626 = vmatpush.msra.mxu0 %v553
        %627 = vmatpush.msra.mxu0 %v549
        %628 = vmatpush.msra.mxu0 %v545
        %629 = vmatpush.msra.mxu0 %v541
        %630 = vmatpush.msra.mxu0 %v537
        %631 = vmatpush.msra.mxu0 %v533
        %632 = vmatpush.msra.mxu0 %v529
        %633 = vmatpush.msra.mxu0 %v525
        %634 = vmatpush.msra.mxu0 %v521
        %635 = vmatpush.msra.mxu0 %v517
        %636 = vmatpush.msra.mxu0 %v513
        %637 = vmatpush.msra.mxu0 %v509
        %638 = vmatpush.msra.mxu0 %v505
        %639 = vmatpush.msra.mxu0 %v501
        %640 = vmatpush.msra.mxu0 %v497
        %641 = vmatpush.msra.mxu0 %v493
        %642 = vmatmul.f32.gmra.mxu0 %v426
        %v643 = vpop.f32.mrf.mxu0
        %v644 = vadd.f32 %v624, %v643
        %645 = vdwg.mxu0
        %646 = vmatpush.msra.mxu0 %v490
        %647 = vmatpush.msra.mxu0 %v486
        %648 = vmatpush.msra.mxu0 %v482
        %649 = vmatpush.msra.mxu0 %v478
        %650 = vmatpush.msra.mxu0 %v474
        %651 = vmatpush.msra.mxu0 %v470
        %652 = vmatpush.msra.mxu0 %v466
        %653 = vmatpush.msra.mxu0 %v462
        %654 = vmatpush.msra.mxu0 %v458
        %655 = vmatpush.msra.mxu0 %v454
        %656 = vmatpush.msra.mxu0 %v450
        %657 = vmatpush.msra.mxu0 %v446
        %658 = vmatpush.msra.mxu0 %v442
        %659 = vmatpush.msra.mxu0 %v438
        %660 = vmatpush.msra.mxu0 %v434
        %661 = vmatpush.msra.mxu0 %v430
        %662 = vmatmul.f32.gmra.mxu0 %v424
        %v663 = vpop.f32.mrf.mxu0
        %v664 = vadd.f32 %v560, %v663
        %665 = vdwg.mxu0
        %666 = vmatpush.msra.mxu0 %v554
        %667 = vmatpush.msra.mxu0 %v550
        %668 = vmatpush.msra.mxu0 %v546
        %669 = vmatpush.msra.mxu0 %v542
        %670 = vmatpush.msra.mxu0 %v538
        %671 = vmatpush.msra.mxu0 %v534
        %672 = vmatpush.msra.mxu0 %v530
        %673 = vmatpush.msra.mxu0 %v526
        %674 = vmatpush.msra.mxu0 %v522
        %675 = vmatpush.msra.mxu0 %v518
        %676 = vmatpush.msra.mxu0 %v514
        %677 = vmatpush.msra.mxu0 %v510
        %678 = vmatpush.msra.mxu0 %v506
        %679 = vmatpush.msra.mxu0 %v502
        %680 = vmatpush.msra.mxu0 %v498
        %681 = vmatpush.msra.mxu0 %v494
        %682 = vmatmul.f32.gmra.mxu0 %v426
        %v683 = vpop.f32.mrf.mxu0
        %v684 = vadd.f32 %v664, %v683
        %685 = vdwg.mxu0
        %686 = vmatpush.msra.mxu0 %v491
        %687 = vmatpush.msra.mxu0 %v487
        %688 = vmatpush.msra.mxu0 %v483
        %689 = vmatpush.msra.mxu0 %v479
        %690 = vmatpush.msra.mxu0 %v475
        %691 = vmatpush.msra.mxu0 %v471
        %692 = vmatpush.msra.mxu0 %v467
        %693 = vmatpush.msra.mxu0 %v463
        %694 = vmatpush.msra.mxu0 %v459
        %695 = vmatpush.msra.mxu0 %v455
        %696 = vmatpush.msra.mxu0 %v451
        %697 = vmatpush.msra.mxu0 %v447
        %698 = vmatpush.msra.mxu0 %v443
        %699 = vmatpush.msra.mxu0 %v439
        %700 = vmatpush.msra.mxu0 %v435
        %701 = vmatpush.msra.mxu0 %v431
        %702 = vmatmul.f32.gmra.mxu0 %v424
        %v703 = vpop.f32.mrf.mxu0
        %v704 = vadd.f32 %v561, %v703
        %705 = vdwg.mxu0
        %706 = vmatpush.msra.mxu0 %v555
        %707 = vmatpush.msra.mxu0 %v551
        %708 = vmatpush.msra.mxu0 %v547
        %709 = vmatpush.msra.mxu0 %v543
        %710 = vmatpush.msra.mxu0 %v539
        %711 = vmatpush.msra.mxu0 %v535
        %712 = vmatpush.msra.mxu0 %v531
        %713 = vmatpush.msra.mxu0 %v527
        %714 = vmatpush.msra.mxu0 %v523
        %715 = vmatpush.msra.mxu0 %v519
        %716 = vmatpush.msra.mxu0 %v515
        %717 = vmatpush.msra.mxu0 %v511
        %718 = vmatpush.msra.mxu0 %v507
        %719 = vmatpush.msra.mxu0 %v503
        %720 = vmatpush.msra.mxu0 %v499
        %721 = vmatpush.msra.mxu0 %v495
        %722 = vmatmul.f32.gmra.mxu0 %v426
        %v723 = vpop.f32.mrf.mxu0
        %v724 = vadd.f32 %v704, %v723
        %725 = vdwg.mxu0
        %v726 = vxor.u32 %v604, 2147483648
        %v727 = vmul.f32 %v726, 1.442695
        %v728 = vpow.pop %v727
        %v729 = vadd.f32 %v728, 1.0
        %v730 = vrcp.pop %v729
        %v731 = vmul.f32 %v729, %v730
        %v732 = vsub.f32 1.0, %v731
        %v733 = vmul.f32 %v730, %v732
        %v734 = vadd.f32 %v730, %v733
        %vm735 = vweird.f32 %v729
        %vm736 = vweird.f32 %v730
        %vm737 = vmor %vm735, %vm736
        %v738 = vsel %vm737, %v730, %v734
        %v739 = vand.u32 2147483647, %v729
        %vm740 = vcmp.eq.f32.partialorder %v739, 8.507059e+37
        %v741 = vand.u32 %v729, 2147483648
        %v742 = vor.u32 1.1754944e-38, %v741
        %v743 = vsel %vm740, %v742, %v738
        %v744 = vmul.f32 1.0, %v743
        %v745 = vxor.u32 %v644, 2147483648
        %v746 = vmul.f32 %v745, 1.442695
        %v747 = vpow.pop %v746
        %v748 = vadd.f32 %v747, 1.0
        %v749 = vrcp.pop %v748
        %v750 = vmul.f32 %v748, %v749
        %v751 = vsub.f32 1.0, %v750
        %v752 = vmul.f32 %v749, %v751
        %v753 = vadd.f32 %v749, %v752
        %vm754 = vweird.f32 %v748
        %vm755 = vweird.f32 %v749
        %vm756 = vmor %vm754, %vm755
        %v757 = vsel %vm756, %v749, %v753
        %v758 = vand.u32 2147483647, %v748
        %vm759 = vcmp.eq.f32.partialorder %v758, 8.507059e+37
        %v760 = vand.u32 %v748, 2147483648
        %v761 = vor.u32 1.1754944e-38, %v760
        %v762 = vsel %vm759, %v761, %v757
        %v763 = vmul.f32 1.0, %v762
        %v764 = vtanh.pop %v684
        %v765 = vxor.u32 %v724, 2147483648
        %v766 = vmul.f32 %v765, 1.442695
        %v767 = vpow.pop %v766
        %v768 = vadd.f32 %v767, 1.0
        %v769 = vrcp.pop %v768
        %v770 = vmul.f32 %v768, %v769
        %v771 = vsub.f32 1.0, %v770
        %v772 = vmul.f32 %v769, %v771
        %v773 = vadd.f32 %v769, %v772
        %vm774 = vweird.f32 %v768
        %vm775 = vweird.f32 %v769
        %vm776 = vmor %vm774, %vm775
        %v777 = vsel %vm776, %v769, %v773
        %v778 = vand.u32 2147483647, %v768
        %vm779 = vcmp.eq.f32.partialorder %v778, 8.507059e+37
        %v780 = vand.u32 %v768, 2147483648
        %v781 = vor.u32 1.1754944e-38, %v780
        %v782 = vsel %vm779, %v781, %v777
        %v783 = vmul.f32 1.0, %v782
        %v784 = vmul.f32 %v763, %v427
        %v785 = vmul.f32 %v744, %v764
        %v786 = vadd.f32 %v784, %v785
        %v787 = vtanh.pop %v786
        %v788 = vmul.f32 %v783, %v787
        %789 = vst [vmem:[#allocation2] sm:$0xff] %v788
        %790 = vst [vmem:[#allocation3] sm:$0xff] %v786
        %v791 = vld [vmem:[%s7] sm:$0xff]
        %v792 = vld [vmem:[%s7 + $0x8] sm:$0xff]
        %v793 = vld [vmem:[%s7 + $0x10] sm:$0xff]
        %v794 = vld [vmem:[%s7 + $0x18] sm:$0xff]
        %v795 = vld [vmem:[%s7 + $0x20] sm:$0xff]
        %v796 = vld [vmem:[%s7 + $0x28] sm:$0xff]
        %v797 = vld [vmem:[%s7 + $0x30] sm:$0xff]
        %v798 = vld [vmem:[%s7 + $0x38] sm:$0xff]
        %v799 = vld [vmem:[%s7 + $0x40] sm:$0xff]
        %v800 = vld [vmem:[%s7 + $0x48] sm:$0xff]
        %v801 = vld [vmem:[%s7 + $0x50] sm:$0xff]
        %v802 = vld [vmem:[%s7 + $0x58] sm:$0xff]
        %v803 = vld [vmem:[%s7 + $0x60] sm:$0xff]
        %v804 = vld [vmem:[%s7 + $0x68] sm:$0xff]
        %v805 = vld [vmem:[%s7 + $0x70] sm:$0xff]
        %v806 = vld [vmem:[%s7 + $0x78] sm:$0xff]
        %v807 = vld [vmem:[%s7 + $0x80] sm:$0xff]
        %v808 = vld [vmem:[%s7 + $0x88] sm:$0xff]
        %v809 = vld [vmem:[%s7 + $0x90] sm:$0xff]
        %v810 = vld [vmem:[%s7 + $0x98] sm:$0xff]
        %v811 = vld [vmem:[%s7 + $0xa0] sm:$0xff]
        %v812 = vld [vmem:[%s7 + $0xa8] sm:$0xff]
        %v813 = vld [vmem:[%s7 + $0xb0] sm:$0xff]
        %v814 = vld [vmem:[%s7 + $0xb8] sm:$0xff]
        %v815 = vld [vmem:[%s7 + $0xc0] sm:$0xff]
        %v816 = vld [vmem:[%s7 + $0xc8] sm:$0xff]
        %v817 = vld [vmem:[%s7 + $0xd0] sm:$0xff]
        %v818 = vld [vmem:[%s7 + $0xd8] sm:$0xff]
        %v819 = vld [vmem:[%s7 + $0xe0] sm:$0xff]
        %v820 = vld [vmem:[%s7 + $0xe8] sm:$0xff]
        %v821 = vld [vmem:[%s7 + $0xf0] sm:$0xff]
        %v822 = vld [vmem:[%s7 + $0xf8] sm:$0xff]
        %v823 = vld [vmem:[%s8] sm:$0x3]
        %v825 = vperm.slane %v823, 0
        %v826 = vperm.slane %v823, 1
        %829 = vmatpush.msra.mxu0 %v821
        %830 = vmatpush.msra.mxu0 %v819
        %831 = vmatpush.msra.mxu0 %v817
        %832 = vmatpush.msra.mxu0 %v815
        %833 = vmatpush.msra.mxu0 %v813
        %834 = vmatpush.msra.mxu0 %v811
        %835 = vmatpush.msra.mxu0 %v809
        %836 = vmatpush.msra.mxu0 %v807
        %837 = vmatpush.msra.mxu0 %v805
        %838 = vmatpush.msra.mxu0 %v803
        %839 = vmatpush.msra.mxu0 %v801
        %840 = vmatpush.msra.mxu0 %v799
        %841 = vmatpush.msra.mxu0 %v797
        %842 = vmatpush.msra.mxu0 %v795
        %843 = vmatpush.msra.mxu0 %v793
        %844 = vmatpush.msra.mxu0 %v791
        %845 = vmatmul.f32.gmra.mxu0 %v788
        %v846 = vpop.f32.mrf.mxu0
        %v847 = vadd.f32 %v825, %v846
        %848 = vdwg.mxu0
        %849 = vmatpush.msra.mxu0 %v822
        %850 = vmatpush.msra.mxu0 %v820
        %851 = vmatpush.msra.mxu0 %v818
        %852 = vmatpush.msra.mxu0 %v816
        %853 = vmatpush.msra.mxu0 %v814
        %854 = vmatpush.msra.mxu0 %v812
        %855 = vmatpush.msra.mxu0 %v810
        %856 = vmatpush.msra.mxu0 %v808
        %857 = vmatpush.msra.mxu0 %v806
        %858 = vmatpush.msra.mxu0 %v804
        %859 = vmatpush.msra.mxu0 %v802
        %860 = vmatpush.msra.mxu0 %v800
        %861 = vmatpush.msra.mxu0 %v798
        %862 = vmatpush.msra.mxu0 %v796
        %863 = vmatpush.msra.mxu0 %v794
        %864 = vmatpush.msra.mxu0 %v792
        %865 = vmatmul.f32.gmra.mxu0 %v788
        %v866 = vpop.f32.mrf.mxu0
        %v867 = vadd.f32 %v826, %v866
        %868 = vdwg.mxu0
        %869 = vst [vmem:[%s331] sm:$0xff] %v847
        %870 = vst [vmem:[%s331 + $0x8] sm:$0xff] %v867
        %v871 = vlaneseq
        %v872 = vand.u32 %v871, 127
        %v873 = vadd.s32 %v872, 128
        %v874 = vmax.f32 %v847, %v867
        %875 = vmax.xlane.f32.xlu0 %v874
        %v876 = vpop.xlane.xlu0 %875
        %vm877 = vcmp.eq.f32.partialorder %v847, %v876
        %vm878 = vcmp.eq.f32.partialorder %v867, %v876
        %v879 = vsel %vm877, %v872, 256
        %v880 = vsel %vm878, %v873, 256
        %vm881 = vcmp.lt.s32.totalorder %v879, %v880
        %v882 = vsel %vm881, %v879, %v880
        %v883 = vand.u32 %v882, 65535
        %v884 = vshra.s32 %v882, 16
        %v885 = vcvt.s32.f32 %v883
        %v886 = vcvt.s32.f32 %v884
        %887 = vmin.xlane.f32.xlu0 %v886
        %v888 = vpop.xlane.xlu0 %887
        %vm889 = vcmp.eq.f32.partialorder %v886, %v888
        %v890 = vsel %vm889, %v885, inf
        %891 = vmin.xlane.f32.xlu0 %v890
        %v892 = vpop.xlane.xlu0 %891
        %v893 = vcvt.f32.s32 %v892
        %v894 = vcvt.f32.s32 %v888
        %v895 = vshll.u32 %v894, 16
        %v896 = vadd.s32 %v895, %v893
        %vm897 = vcmp.eq.s32.totalorder %v872, %v896
        %vm898 = vcmp.eq.s32.totalorder %v873, %v896
        %v899 = vsel %vm897, 1, 0
        %v900 = vsel %vm898, 1, 0
        %v901 = vcvt.s32.f32 %v899
        %v902 = vcvt.s32.f32 %v900
        %903 = vst [vmem:[#allocation4] sm:$0xff] %v901
        %904 = vst [vmem:[#allocation4 + $0x8] sm:$0xff] %v902
        %p905 = scmp.lt.s32.totalorder %s29, 6
        %s906 = scalar_select %p905, %s29, 6
        %s907 = smul.addr %s906, 2
        %s908 = smul.addr %s907, 8
        %s909 = scalar_lea.vmem %s9, %s908
        // Predicated region
        $region61: #{seq2seq_forward.3} parent=51 // pred_check
          %p910 = pneg %p220
        $region62: #{seq2seq_forward.3} parent=51 // pred_check_branch
          %912 = sbr.rel (%p910) target = $region64
        $region63: #{seq2seq_forward.3} parent=51 // pred_region
          _
        $region64: #{seq2seq_forward.3} parent=51 // pred_fallthru
          _
      $region52: #{seq2seq_forward.3} parent=5 // pred_fallthru
        _
      %p913 = scmp.le.s32.totalorder 2, %s24
      // Predicated region
      $region65: #{seq2seq_forward.3} parent=5 // pred_check
        %p914 = pneg %p913
      $region66: #{seq2seq_forward.3} parent=5 // pred_check_branch
        %916 = sbr.rel (%p914) target = $region68
      $region67: #{seq2seq_forward.3} parent=5 // pred_region
        %s917 = ssub.s32 %s24, 2
        // Predicated region
        $region69: #{seq2seq_forward.3} parent=67 // pred_check
          %p918 = pneg %p226
        $region70: #{seq2seq_forward.3} parent=67 // pred_check_branch
          %920 = sbr.rel (%p918) target = $region72
        $region71: #{seq2seq_forward.3} parent=67 // pred_region
          %p921 = scmp.lt.s32.totalorder %s30, 6
          %s922 = scalar_select %p921, %s30, 6
          %s923 = smul.addr %s922, 2
          %s924 = smul.addr %s923, 8
          %s925 = scalar_lea.vmem %s9, %s924
        $region72: #{seq2seq_forward.3} parent=67 // pred_fallthru
          _
      $region68: #{seq2seq_forward.3} parent=5 // pred_fallthru
        _
    $region6: #{seq2seq_forward.3} parent=1 // loop_footer
      %s28 = sadd.s32 1, %s24
    $region7: #{seq2seq_forward.3} parent=1 // loop_footer_branch
      %23 = sbr.rel target = $region3
    $region8: #{seq2seq_forward.3} parent=1 // loop_exit
      _
    %926 = vsyncpa [#allocation8], 1
    %s927 = scalar_lea.sflag [#allocation8], 1
    %928 = vsyncpa %s927, 1

// kernel: seq2seq_forward.2
$region0: #{seq2seq_forward.2}
  #allocation0 [shape = 'u32[]', space=smem, size = 0x4, offset = 0x4, fixed_abs, tag = 'smem constant byte address 0x4 - core index']
  #allocation1 [shape = 'u32[72,128]{1,0:T(1,128)}', space=vmem, size = 0x9000, scoped, tag = 'internal scratch']
  #allocation2 [shape = 'f32[8,128]{1,0:T(8,128)}', space=vmem, size = 0x1000, scoped, tag = 'scratch operand']
  #allocation3 [shape = 'f32[8,128]{1,0:T(8,128)}', space=vmem, size = 0x1000, scoped, tag = 'scratch operand']
  %s0 = inlined_call_operand.vmem [shape: f32[8,8,128], index: 0, kind: input, shape index: {}]
  %s1 = inlined_call_operand.hbm [shape: f32[256,512], index: 1, kind: input, shape index: {}]
  %s2 = inlined_call_operand.vmem [shape: f32[1,512], index: 2, kind: input, shape index: {}]
  %s3 = inlined_call_operand.vmem [shape: f32[8,128], index: 3, kind: output, shape index: {0}]
  %s4 = inlined_call_operand.vmem [shape: f32[8,128], index: 4, kind: output, shape index: {1}]
  %5 = xla_tuple %s3, %s4
  %s6 = sld [smem:[#allocation0]]
  $region65: #{seq2seq_forward.2} parent=0
    _
  %s8 = ssub.s32 1, %s6
  %s9 = scalar_select 0, %s8, %s6
  $region1: #{seq2seq_forward.2} parent=0
    #allocation4 [shape = 'u8[524288]{0}', space=vmem, size = 0x80000, scoped, tag = 'input window, operand 1, single buffered']
    #allocation5 [shape = 's32[2]{0}', space=sflag, size = 0x8, scoped, tag = 'scoped memory for seq2seq_forward.2']
    %10 = vsyncpa [#allocation5], 0
    loop: start=0, step=1, limit=10
    $region2: #{seq2seq_forward.2} parent=1 // loop_pre_header
      _
    $region3: #{seq2seq_forward.2} parent=1 // loop_header
      %s12 = sphi 0, %s16
      %p13 = scmp.ge.s32.totalorder %s12, 10
      %s22 = sphi 0, %s24
      %s25 = sphi 0, %s22
      %s26 = sphi 0, %s25
      %s42 = sphi 0, %s26
      %s46 = sphi 0, %s46
      %s48 = sphi 0, %s46
      %s49 = sphi 0, %s48
      %s63 = sphi 0, %s49
      %s67 = sphi 0, %s67
      %s69 = sphi 0, %s67
      %s70 = sphi 0, %s69
      %s84 = sphi 0, %s70
      %s88 = sphi 0, %s88
      %s90 = sphi 0, %s88
      %s91 = sphi 0, %s90
      %s105 = sphi 0, %s91
      %s109 = sphi 0, %s109
      %s111 = sphi 0, %s109
      %s112 = sphi 0, %s111
      %s126 = sphi 0, %s112
    $region4: #{seq2seq_forward.2} parent=1 // loop_header_branch
      %15 = sbr.rel (%p13) target = $region8
    $region5: #{seq2seq_forward.2} parent=1 // loop_body
      %s17 = ssub.s32 %s12, 1
      %s18 = ssub.s32 %s12, 2
      %s19 = sadd.s32 %s12, 1
      %s20 = ssub.s32 %s12, %s19
      %p21 = scmp.eq.s32.totalorder %s20, 0
      %s23 = sadd.s32 %s22, 1
      %s24 = scalar_select %p21, %s22, %s23
      %p27 = pneg %p21
      %p28 = scmp.eq.s32.totalorder %s12, 7
      %p29 = por %p27, %p28
      %p30 = scmp.ne.s32.totalorder %s22, %s25
      %p31 = scmp.eq.s32.totalorder %s12, 0
      %p32 = por %p30, %p31
      %p33 = scmp.ne.s32.totalorder %s22, %s25
      %p34 = scmp.eq.s32.totalorder %s17, 7
      %p35 = por %p33, %p34
      %p36 = scmp.ne.s32.totalorder %s25, %s26
      %p37 = scmp.eq.s32.totalorder %s17, 0
      %p38 = por %p36, %p37
      %p39 = scmp.ne.s32.totalorder %s25, %s26
      %p40 = scmp.eq.s32.totalorder %s18, 7
      %p41 = por %p39, %p40
      %p43 = scmp.ne.s32.totalorder %s26, %s42
      %p44 = scmp.eq.s32.totalorder %s18, 0
      %p45 = por %p43, %p44
      %s47 = sadd.s32 %s46, 1
      %p50 = scmp.eq.s32.totalorder %s12, 7
      %p51 = scmp.ne.s32.totalorder %s46, %s48
      %p52 = scmp.eq.s32.totalorder %s12, 0
      %p53 = por %p51, %p52
      %p54 = scmp.ne.s32.totalorder %s46, %s48
      %p55 = scmp.eq.s32.totalorder %s17, 7
      %p56 = por %p54, %p55
      %p57 = scmp.ne.s32.totalorder %s48, %s49
      %p58 = scmp.eq.s32.totalorder %s17, 0
      %p59 = por %p57, %p58
      %p60 = scmp.ne.s32.totalorder %s48, %s49
      %p61 = scmp.eq.s32.totalorder %s18, 7
      %p62 = por %p60, %p61
      %p64 = scmp.ne.s32.totalorder %s49, %s63
      %p65 = scmp.eq.s32.totalorder %s18, 0
      %p66 = por %p64, %p65
      %s68 = sadd.s32 %s67, 1
      %p71 = scmp.eq.s32.totalorder %s12, 7
      %p72 = scmp.ne.s32.totalorder %s67, %s69
      %p73 = scmp.eq.s32.totalorder %s12, 0
      %p74 = por %p72, %p73
      %p75 = scmp.ne.s32.totalorder %s67, %s69
      %p76 = scmp.eq.s32.totalorder %s17, 7
      %p77 = por %p75, %p76
      %p78 = scmp.ne.s32.totalorder %s69, %s70
      %p79 = scmp.eq.s32.totalorder %s17, 0
      %p80 = por %p78, %p79
      %p81 = scmp.ne.s32.totalorder %s69, %s70
      %p82 = scmp.eq.s32.totalorder %s18, 7
      %p83 = por %p81, %p82
      %p85 = scmp.ne.s32.totalorder %s70, %s84
      %p86 = scmp.eq.s32.totalorder %s18, 0
      %p87 = por %p85, %p86
      %s89 = sadd.s32 %s88, 1
      %p92 = scmp.eq.s32.totalorder %s12, 7
      %p93 = scmp.ne.s32.totalorder %s88, %s90
      %p94 = scmp.eq.s32.totalorder %s12, 0
      %p95 = por %p93, %p94
      %p96 = scmp.ne.s32.totalorder %s88, %s90
      %p97 = scmp.eq.s32.totalorder %s17, 7
      %p98 = por %p96, %p97
      %p99 = scmp.ne.s32.totalorder %s90, %s91
      %p100 = scmp.eq.s32.totalorder %s17, 0
      %p101 = por %p99, %p100
      %p102 = scmp.ne.s32.totalorder %s90, %s91
      %p103 = scmp.eq.s32.totalorder %s18, 7
      %p104 = por %p102, %p103
      %p106 = scmp.ne.s32.totalorder %s91, %s105
      %p107 = scmp.eq.s32.totalorder %s18, 0
      %p108 = por %p106, %p107
      %s110 = sadd.s32 %s109, 1
      %p113 = scmp.eq.s32.totalorder %s12, 7
      %p114 = scmp.ne.s32.totalorder %s109, %s111
      %p115 = scmp.eq.s32.totalorder %s12, 0
      %p116 = por %p114, %p115
      %p117 = scmp.ne.s32.totalorder %s109, %s111
      %p118 = scmp.eq.s32.totalorder %s17, 7
      %p119 = por %p117, %p118
      %p120 = scmp.ne.s32.totalorder %s111, %s112
      %p121 = scmp.eq.s32.totalorder %s17, 0
      %p122 = por %p120, %p121
      %p123 = scmp.ne.s32.totalorder %s111, %s112
      %p124 = scmp.eq.s32.totalorder %s18, 7
      %p125 = por %p123, %p124
      %p127 = scmp.ne.s32.totalorder %s112, %s126
      %p128 = scmp.eq.s32.totalorder %s18, 0
      %p129 = por %p127, %p128
      %p130 = scmp.le.s32.totalorder 1, %s12
      %p131 = scmp.lt.s32.totalorder %s12, 9
      %p132 = pnand %p130, %p131
      %p133 = pneg %p132
      // Predicated region
      $region9: #{seq2seq_forward.2} parent=5 // pred_check
        _
      $region10: #{seq2seq_forward.2} parent=5 // pred_check_branch
        %135 = sbr.rel (%p132) target = $region12
      $region11: #{seq2seq_forward.2} parent=5 // pred_region
        %s136 = ssub.s32 %s12, 1
        // Predicated region
        $region13: #{seq2seq_forward.2} parent=11 // pred_check
          %p137 = pneg %p59
        $region14: #{seq2seq_forward.2} parent=11 // pred_check_branch
          %139 = sbr.rel (%p137) target = $region16
        $region15: #{seq2seq_forward.2} parent=11 // pred_region
          %141 = vsyncadd [#allocation5], 0
          %s142 = sshll.u32 %s1, 4
          %s143 = int_to_ptr.hbm [resolvable:$true] %s142
          %s144 = sshll.u32 [#allocation4], 4
          %s145 = int_to_ptr.vmem [resolvable:$true] %s144
          %150 = dma.hbm_to_vmem [thread:$0]  %s143, 16384, %s145, [#allocation5], 512, 512, 32
        $region16: #{seq2seq_forward.2} parent=11 // pred_fallthru
          _
        // Predicated region
        $region17: #{seq2seq_forward.2} parent=11 // pred_check
          %p151 = pneg %p80
        $region18: #{seq2seq_forward.2} parent=11 // pred_check_branch
          %153 = sbr.rel (%p151) target = $region20
        $region19: #{seq2seq_forward.2} parent=11 // pred_region
          _
        $region20: #{seq2seq_forward.2} parent=11 // pred_fallthru
          _
      $region12: #{seq2seq_forward.2} parent=5 // pred_fallthru
        _
      %p154 = scmp.lt.s32.totalorder %s12, 8
      // Predicated region
      $region21: #{seq2seq_forward.2} parent=5 // pred_check
        %p155 = pneg %p154
      $region22: #{seq2seq_forward.2} parent=5 // pred_check_branch
        %157 = sbr.rel (%p155) target = $region24
      $region23: #{seq2seq_forward.2} parent=5 // pred_region
        // Predicated region
        $region25: #{seq2seq_forward.2} parent=23 // pred_check
          %p158 = pneg %p32
        $region26: #{seq2seq_forward.2} parent=23 // pred_check_branch
          %160 = sbr.rel (%p158) target = $region28
        $region27: #{seq2seq_forward.2} parent=23 // pred_region
          %p161 = scmp.lt.s32.totalorder %s12, 7
          %s162 = scalar_select %p161, %s12, 7
          %s163 = smul.addr %s162, 8
          %s164 = scalar_lea.vmem %s0, %s163
        $region28: #{seq2seq_forward.2} parent=23 // pred_fallthru
          _
      $region24: #{seq2seq_forward.2} parent=5 // pred_fallthru
        _
      %p165 = scmp.le.s32.totalorder 1, %s12
      %p166 = scmp.lt.s32.totalorder %s12, 9
      %p167 = pnand %p165, %p166
      %p168 = pneg %p167
      // Predicated region
      $region29: #{seq2seq_forward.2} parent=5 // pred_check
        _
      $region30: #{seq2seq_forward.2} parent=5 // pred_check_branch
        %170 = sbr.rel (%p167) target = $region32
      $region31: #{seq2seq_forward.2} parent=5 // pred_region
        %s171 = ssub.s32 %s12, 1
        // Predicated region
        $region33: #{seq2seq_forward.2} parent=31 // pred_check
          %p172 = pneg %p59
        $region34: #{seq2seq_forward.2} parent=31 // pred_check_branch
          %174 = sbr.rel (%p172) target = $region36
        $region35: #{seq2seq_forward.2} parent=31 // pred_region
          %176 = dma.done [#allocation5], 16384
        $region36: #{seq2seq_forward.2} parent=31 // pred_fallthru
          _
        %p177 = scmp.lt.s32.totalorder %s17, 7
        %s178 = scalar_select %p177, %s17, 7
        %s179 = smul.addr %s178, 8
        %s180 = scalar_lea.vmem %s0, %s179
        %p181 = pneg %p38
        %p182 = pneg %p35
        %p183 = pneg %p59
        %p184 = pneg %p56
        %p185 = pneg %p80
        %p186 = pneg %p77
        %p187 = pneg %p101
        %p188 = pneg %p98
        %p189 = pneg %p122
        %p190 = pneg %p119
        %p191 = scmp.lt.s32.totalorder %s17, 7
        %s192 = scalar_select %p191, %s17, 7
        %s193 = smul.addr %s192, 8
        %s194 = scalar_lea.vmem %s0, %s193
        %p195 = scmp.eq.s32.totalorder %s17, 0
        // Predicated region
        $region37: #{seq2seq_forward.2} parent=31 // pred_check
          %p196 = pneg %p195
        $region38: #{seq2seq_forward.2} parent=31 // pred_check_branch
          %198 = sbr.rel (%p196) target = $region40
        $region39: #{seq2seq_forward.2} parent=31 // pred_region
          %199 = vst [vmem:[#allocation2] sm:$0xff] 0.0
          %200 = vst [vmem:[#allocation3] sm:$0xff] 0.0
        $region40: #{seq2seq_forward.2} parent=31 // pred_fallthru
          _
        %v201 = vld [vmem:[%s194] sm:$0xff]
        %v202 = vld [vmem:[#allocation2] sm:$0xff]
        %v203 = vld [vmem:[#allocation3] sm:$0xff]
        %v204 = vld [vmem:[#allocation4] sm:$0xff]
        %v205 = vld [vmem:[#allocation4 + $0x8] sm:$0xff]
        %v206 = vld [vmem:[#allocation4 + $0x10] sm:$0xff]
        %v207 = vld [vmem:[#allocation4 + $0x18] sm:$0xff]
        %v208 = vld [vmem:[#allocation4 + $0x20] sm:$0xff]
        %v209 = vld [vmem:[#allocation4 + $0x28] sm:$0xff]
        %v210 = vld [vmem:[#allocation4 + $0x30] sm:$0xff]
        %v211 = vld [vmem:[#allocation4 + $0x38] sm:$0xff]
        %v212 = vld [vmem:[#allocation4 + $0x40] sm:$0xff]
        %v213 = vld [vmem:[#allocation4 + $0x48] sm:$0xff]
        %v214 = vld [vmem:[#allocation4 + $0x50] sm:$0xff]
        %v215 = vld [vmem:[#allocation4 + $0x58] sm:$0xff]
        %v216 = vld [vmem:[#allocation4 + $0x60] sm:$0xff]
        %v217 = vld [vmem:[#allocation4 + $0x68] sm:$0xff]
        %v218 = vld [vmem:[#allocation4 + $0x70] sm:$0xff]
        %v219 = vld [vmem:[#allocation4 + $0x78] sm:$0xff]
        %v220 = vld [vmem:[#allocation4 + $0x80] sm:$0xff]
        %v221 = vld [vmem:[#allocation4 + $0x88] sm:$0xff]
        %v222 = vld [vmem:[#allocation4 + $0x90] sm:$0xff]
        %v223 = vld [vmem:[#allocation4 + $0x98] sm:$0xff]
        %v224 = vld [vmem:[#allocation4 + $0xa0] sm:$0xff]
        %v225 = vld [vmem:[#allocation4 + $0xa8] sm:$0xff]
        %v226 = vld [vmem:[#allocation4 + $0xb0] sm:$0xff]
        %v227 = vld [vmem:[#allocation4 + $0xb8] sm:$0xff]
        %v228 = vld [vmem:[#allocation4 + $0xc0] sm:$0xff]
        %v229 = vld [vmem:[#allocation4 + $0xc8] sm:$0xff]
        %v230 = vld [vmem:[#allocation4 + $0xd0] sm:$0xff]
        %v231 = vld [vmem:[#allocation4 + $0xd8] sm:$0xff]
        %v232 = vld [vmem:[#allocation4 + $0xe0] sm:$0xff]
        %v233 = vld [vmem:[#allocation4 + $0xe8] sm:$0xff]
        %v234 = vld [vmem:[#allocation4 + $0xf0] sm:$0xff]
        %v235 = vld [vmem:[#allocation4 + $0xf8] sm:$0xff]
        %v236 = vld [vmem:[#allocation4 + $0x100] sm:$0xff]
        %v237 = vld [vmem:[#allocation4 + $0x108] sm:$0xff]
        %v238 = vld [vmem:[#allocation4 + $0x110] sm:$0xff]
        %v239 = vld [vmem:[#allocation4 + $0x118] sm:$0xff]
        %v240 = vld [vmem:[#allocation4 + $0x120] sm:$0xff]
        %v241 = vld [vmem:[#allocation4 + $0x128] sm:$0xff]
        %v242 = vld [vmem:[#allocation4 + $0x130] sm:$0xff]
        %v243 = vld [vmem:[#allocation4 + $0x138] sm:$0xff]
        %v244 = vld [vmem:[#allocation4 + $0x140] sm:$0xff]
        %v245 = vld [vmem:[#allocation4 + $0x148] sm:$0xff]
        %v246 = vld [vmem:[#allocation4 + $0x150] sm:$0xff]
        %v247 = vld [vmem:[#allocation4 + $0x158] sm:$0xff]
        %v248 = vld [vmem:[#allocation4 + $0x160] sm:$0xff]
        %v249 = vld [vmem:[#allocation4 + $0x168] sm:$0xff]
        %v250 = vld [vmem:[#allocation4 + $0x170] sm:$0xff]
        %v251 = vld [vmem:[#allocation4 + $0x178] sm:$0xff]
        %v252 = vld [vmem:[#allocation4 + $0x180] sm:$0xff]
        %v253 = vld [vmem:[#allocation4 + $0x188] sm:$0xff]
        %v254 = vld [vmem:[#allocation4 + $0x190] sm:$0xff]
        %v255 = vld [vmem:[#allocation4 + $0x198] sm:$0xff]
        %v256 = vld [vmem:[#allocation4 + $0x1a0] sm:$0xff]
        %v257 = vld [vmem:[#allocation4 + $0x1a8] sm:$0xff]
        %v258 = vld [vmem:[#allocation4 + $0x1b0] sm:$0xff]
        %v259 = vld [vmem:[#allocation4 + $0x1b8] sm:$0xff]
        %v260 = vld [vmem:[#allocation4 + $0x1c0] sm:$0xff]
        %v261 = vld [vmem:[#allocation4 + $0x1c8] sm:$0xff]
        %v262 = vld [vmem:[#allocation4 + $0x1d0] sm:$0xff]
        %v263 = vld [vmem:[#allocation4 + $0x1d8] sm:$0xff]
        %v264 = vld [vmem:[#allocation4 + $0x1e0] sm:$0xff]
        %v265 = vld [vmem:[#allocation4 + $0x1e8] sm:$0xff]
        %v266 = vld [vmem:[#allocation4 + $0x1f0] sm:$0xff]
        %v267 = vld [vmem:[#allocation4 + $0x1f8] sm:$0xff]
        %v268 = vld [vmem:[#allocation4 + $0x200] sm:$0xff]
        %v269 = vld [vmem:[#allocation4 + $0x208] sm:$0xff]
        %v270 = vld [vmem:[#allocation4 + $0x210] sm:$0xff]
        %v271 = vld [vmem:[#allocation4 + $0x218] sm:$0xff]
        %v272 = vld [vmem:[#allocation4 + $0x220] sm:$0xff]
        %v273 = vld [vmem:[#allocation4 + $0x228] sm:$0xff]
        %v274 = vld [vmem:[#allocation4 + $0x230] sm:$0xff]
        %v275 = vld [vmem:[#allocation4 + $0x238] sm:$0xff]
        %v276 = vld [vmem:[#allocation4 + $0x240] sm:$0xff]
        %v277 = vld [vmem:[#allocation4 + $0x248] sm:$0xff]
        %v278 = vld [vmem:[#allocation4 + $0x250] sm:$0xff]
        %v279 = vld [vmem:[#allocation4 + $0x258] sm:$0xff]
        %v280 = vld [vmem:[#allocation4 + $0x260] sm:$0xff]
        %v281 = vld [vmem:[#allocation4 + $0x268] sm:$0xff]
        %v282 = vld [vmem:[#allocation4 + $0x270] sm:$0xff]
        %v283 = vld [vmem:[#allocation4 + $0x278] sm:$0xff]
        %v284 = vld [vmem:[#allocation4 + $0x280] sm:$0xff]
        %v285 = vld [vmem:[#allocation4 + $0x288] sm:$0xff]
        %v286 = vld [vmem:[#allocation4 + $0x290] sm:$0xff]
        %v287 = vld [vmem:[#allocation4 + $0x298] sm:$0xff]
        %v288 = vld [vmem:[#allocation4 + $0x2a0] sm:$0xff]
        %v289 = vld [vmem:[#allocation4 + $0x2a8] sm:$0xff]
        %v290 = vld [vmem:[#allocation4 + $0x2b0] sm:$0xff]
        %v291 = vld [vmem:[#allocation4 + $0x2b8] sm:$0xff]
        %v292 = vld [vmem:[#allocation4 + $0x2c0] sm:$0xff]
        %v293 = vld [vmem:[#allocation4 + $0x2c8] sm:$0xff]
        %v294 = vld [vmem:[#allocation4 + $0x2d0] sm:$0xff]
        %v295 = vld [vmem:[#allocation4 + $0x2d8] sm:$0xff]
        %v296 = vld [vmem:[#allocation4 + $0x2e0] sm:$0xff]
        %v297 = vld [vmem:[#allocation4 + $0x2e8] sm:$0xff]
        %v298 = vld [vmem:[#allocation4 + $0x2f0] sm:$0xff]
        %v299 = vld [vmem:[#allocation4 + $0x2f8] sm:$0xff]
        %v300 = vld [vmem:[#allocation4 + $0x300] sm:$0xff]
        %v301 = vld [vmem:[#allocation4 + $0x308] sm:$0xff]
        %v302 = vld [vmem:[#allocation4 + $0x310] sm:$0xff]
        %v303 = vld [vmem:[#allocation4 + $0x318] sm:$0xff]
        %v304 = vld [vmem:[#allocation4 + $0x320] sm:$0xff]
        %v305 = vld [vmem:[#allocation4 + $0x328] sm:$0xff]
        %v306 = vld [vmem:[#allocation4 + $0x330] sm:$0xff]
        %v307 = vld [vmem:[#allocation4 + $0x338] sm:$0xff]
        %v308 = vld [vmem:[#allocation4 + $0x340] sm:$0xff]
        %v309 = vld [vmem:[#allocation4 + $0x348] sm:$0xff]
        %v310 = vld [vmem:[#allocation4 + $0x350] sm:$0xff]
        %v311 = vld [vmem:[#allocation4 + $0x358] sm:$0xff]
        %v312 = vld [vmem:[#allocation4 + $0x360] sm:$0xff]
        %v313 = vld [vmem:[#allocation4 + $0x368] sm:$0xff]
        %v314 = vld [vmem:[#allocation4 + $0x370] sm:$0xff]
        %v315 = vld [vmem:[#allocation4 + $0x378] sm:$0xff]
        %v316 = vld [vmem:[#allocation4 + $0x380] sm:$0xff]
        %v317 = vld [vmem:[#allocation4 + $0x388] sm:$0xff]
        %v318 = vld [vmem:[#allocation4 + $0x390] sm:$0xff]
        %v319 = vld [vmem:[#allocation4 + $0x398] sm:$0xff]
        %v320 = vld [vmem:[#allocation4 + $0x3a0] sm:$0xff]
        %v321 = vld [vmem:[#allocation4 + $0x3a8] sm:$0xff]
        %v322 = vld [vmem:[#allocation4 + $0x3b0] sm:$0xff]
        %v323 = vld [vmem:[#allocation4 + $0x3b8] sm:$0xff]
        %v324 = vld [vmem:[#allocation4 + $0x3c0] sm:$0xff]
        %v325 = vld [vmem:[#allocation4 + $0x3c8] sm:$0xff]
        %v326 = vld [vmem:[#allocation4 + $0x3d0] sm:$0xff]
        %v327 = vld [vmem:[#allocation4 + $0x3d8] sm:$0xff]
        %v328 = vld [vmem:[#allocation4 + $0x3e0] sm:$0xff]
        %v329 = vld [vmem:[#allocation4 + $0x3e8] sm:$0xff]
        %v330 = vld [vmem:[#allocation4 + $0x3f0] sm:$0xff]
        %v331 = vld [vmem:[#allocation4 + $0x3f8] sm:$0xff]
        %v332 = vld [vmem:[%s2] sm:$0xf]
        %v334 = vperm.slane %v332, 0
        %v335 = vperm.slane %v332, 1
        %v336 = vperm.slane %v332, 2
        %v337 = vperm.slane %v332, 3
        %342 = vmatpush.msra.mxu0 %v264
        %343 = vmatpush.msra.mxu0 %v260
        %344 = vmatpush.msra.mxu0 %v256
        %345 = vmatpush.msra.mxu0 %v252
        %346 = vmatpush.msra.mxu0 %v248
        %347 = vmatpush.msra.mxu0 %v244
        %348 = vmatpush.msra.mxu0 %v240
        %349 = vmatpush.msra.mxu0 %v236
        %350 = vmatpush.msra.mxu0 %v232
        %351 = vmatpush.msra.mxu0 %v228
        %352 = vmatpush.msra.mxu0 %v224
        %353 = vmatpush.msra.mxu0 %v220
        %354 = vmatpush.msra.mxu0 %v216
        %355 = vmatpush.msra.mxu0 %v212
        %356 = vmatpush.msra.mxu0 %v208
        %357 = vmatpush.msra.mxu0 %v204
        %358 = vmatmul.f32.gmra.mxu0 %v201
        %v359 = vpop.f32.mrf.mxu0
        %v360 = vadd.f32 %v334, %v359
        %361 = vdwg.mxu0
        %362 = vmatpush.msra.mxu0 %v328
        %363 = vmatpush.msra.mxu0 %v324
        %364 = vmatpush.msra.mxu0 %v320
        %365 = vmatpush.msra.mxu0 %v316
        %366 = vmatpush.msra.mxu0 %v312
        %367 = vmatpush.msra.mxu0 %v308
        %368 = vmatpush.msra.mxu0 %v304
        %369 = vmatpush.msra.mxu0 %v300
        %370 = vmatpush.msra.mxu0 %v296
        %371 = vmatpush.msra.mxu0 %v292
        %372 = vmatpush.msra.mxu0 %v288
        %373 = vmatpush.msra.mxu0 %v284
        %374 = vmatpush.msra.mxu0 %v280
        %375 = vmatpush.msra.mxu0 %v276
        %376 = vmatpush.msra.mxu0 %v272
        %377 = vmatpush.msra.mxu0 %v268
        %378 = vmatmul.f32.gmra.mxu0 %v202
        %v379 = vpop.f32.mrf.mxu0
        %v380 = vadd.f32 %v360, %v379
        %381 = vdwg.mxu0
        %382 = vmatpush.msra.mxu0 %v265
        %383 = vmatpush.msra.mxu0 %v261
        %384 = vmatpush.msra.mxu0 %v257
        %385 = vmatpush.msra.mxu0 %v253
        %386 = vmatpush.msra.mxu0 %v249
        %387 = vmatpush.msra.mxu0 %v245
        %388 = vmatpush.msra.mxu0 %v241
        %389 = vmatpush.msra.mxu0 %v237
        %390 = vmatpush.msra.mxu0 %v233
        %391 = vmatpush.msra.mxu0 %v229
        %392 = vmatpush.msra.mxu0 %v225
        %393 = vmatpush.msra.mxu0 %v221
        %394 = vmatpush.msra.mxu0 %v217
        %395 = vmatpush.msra.mxu0 %v213
        %396 = vmatpush.msra.mxu0 %v209
        %397 = vmatpush.msra.mxu0 %v205
        %398 = vmatmul.f32.gmra.mxu0 %v201
        %v399 = vpop.f32.mrf.mxu0
        %v400 = vadd.f32 %v335, %v399
        %401 = vdwg.mxu0
        %402 = vmatpush.msra.mxu0 %v329
        %403 = vmatpush.msra.mxu0 %v325
        %404 = vmatpush.msra.mxu0 %v321
        %405 = vmatpush.msra.mxu0 %v317
        %406 = vmatpush.msra.mxu0 %v313
        %407 = vmatpush.msra.mxu0 %v309
        %408 = vmatpush.msra.mxu0 %v305
        %409 = vmatpush.msra.mxu0 %v301
        %410 = vmatpush.msra.mxu0 %v297
        %411 = vmatpush.msra.mxu0 %v293
        %412 = vmatpush.msra.mxu0 %v289
        %413 = vmatpush.msra.mxu0 %v285
        %414 = vmatpush.msra.mxu0 %v281
        %415 = vmatpush.msra.mxu0 %v277
        %416 = vmatpush.msra.mxu0 %v273
        %417 = vmatpush.msra.mxu0 %v269
        %418 = vmatmul.f32.gmra.mxu0 %v202
        %v419 = vpop.f32.mrf.mxu0
        %v420 = vadd.f32 %v400, %v419
        %421 = vdwg.mxu0
        %422 = vmatpush.msra.mxu0 %v266
        %423 = vmatpush.msra.mxu0 %v262
        %424 = vmatpush.msra.mxu0 %v258
        %425 = vmatpush.msra.mxu0 %v254
        %426 = vmatpush.msra.mxu0 %v250
        %427 = vmatpush.msra.mxu0 %v246
        %428 = vmatpush.msra.mxu0 %v242
        %429 = vmatpush.msra.mxu0 %v238
        %430 = vmatpush.msra.mxu0 %v234
        %431 = vmatpush.msra.mxu0 %v230
        %432 = vmatpush.msra.mxu0 %v226
        %433 = vmatpush.msra.mxu0 %v222
        %434 = vmatpush.msra.mxu0 %v218
        %435 = vmatpush.msra.mxu0 %v214
        %436 = vmatpush.msra.mxu0 %v210
        %437 = vmatpush.msra.mxu0 %v206
        %438 = vmatmul.f32.gmra.mxu0 %v201
        %v439 = vpop.f32.mrf.mxu0
        %v440 = vadd.f32 %v336, %v439
        %441 = vdwg.mxu0
        %442 = vmatpush.msra.mxu0 %v330
        %443 = vmatpush.msra.mxu0 %v326
        %444 = vmatpush.msra.mxu0 %v322
        %445 = vmatpush.msra.mxu0 %v318
        %446 = vmatpush.msra.mxu0 %v314
        %447 = vmatpush.msra.mxu0 %v310
        %448 = vmatpush.msra.mxu0 %v306
        %449 = vmatpush.msra.mxu0 %v302
        %450 = vmatpush.msra.mxu0 %v298
        %451 = vmatpush.msra.mxu0 %v294
        %452 = vmatpush.msra.mxu0 %v290
        %453 = vmatpush.msra.mxu0 %v286
        %454 = vmatpush.msra.mxu0 %v282
        %455 = vmatpush.msra.mxu0 %v278
        %456 = vmatpush.msra.mxu0 %v274
        %457 = vmatpush.msra.mxu0 %v270
        %458 = vmatmul.f32.gmra.mxu0 %v202
        %v459 = vpop.f32.mrf.mxu0
        %v460 = vadd.f32 %v440, %v459
        %461 = vdwg.mxu0
        %462 = vmatpush.msra.mxu0 %v267
        %463 = vmatpush.msra.mxu0 %v263
        %464 = vmatpush.msra.mxu0 %v259
        %465 = vmatpush.msra.mxu0 %v255
        %466 = vmatpush.msra.mxu0 %v251
        %467 = vmatpush.msra.mxu0 %v247
        %468 = vmatpush.msra.mxu0 %v243
        %469 = vmatpush.msra.mxu0 %v239
        %470 = vmatpush.msra.mxu0 %v235
        %471 = vmatpush.msra.mxu0 %v231
        %472 = vmatpush.msra.mxu0 %v227
        %473 = vmatpush.msra.mxu0 %v223
        %474 = vmatpush.msra.mxu0 %v219
        %475 = vmatpush.msra.mxu0 %v215
        %476 = vmatpush.msra.mxu0 %v211
        %477 = vmatpush.msra.mxu0 %v207
        %478 = vmatmul.f32.gmra.mxu0 %v201
        %v479 = vpop.f32.mrf.mxu0
        %v480 = vadd.f32 %v337, %v479
        %481 = vdwg.mxu0
        %482 = vmatpush.msra.mxu0 %v331
        %483 = vmatpush.msra.mxu0 %v327
        %484 = vmatpush.msra.mxu0 %v323
        %485 = vmatpush.msra.mxu0 %v319
        %486 = vmatpush.msra.mxu0 %v315
        %487 = vmatpush.msra.mxu0 %v311
        %488 = vmatpush.msra.mxu0 %v307
        %489 = vmatpush.msra.mxu0 %v303
        %490 = vmatpush.msra.mxu0 %v299
        %491 = vmatpush.msra.mxu0 %v295
        %492 = vmatpush.msra.mxu0 %v291
        %493 = vmatpush.msra.mxu0 %v287
        %494 = vmatpush.msra.mxu0 %v283
        %495 = vmatpush.msra.mxu0 %v279
        %496 = vmatpush.msra.mxu0 %v275
        %497 = vmatpush.msra.mxu0 %v271
        %498 = vmatmul.f32.gmra.mxu0 %v202
        %v499 = vpop.f32.mrf.mxu0
        %v500 = vadd.f32 %v480, %v499
        %501 = vdwg.mxu0
        %v502 = vxor.u32 %v380, 2147483648
        %v503 = vmul.f32 %v502, 1.442695
        %v504 = vpow.pop %v503
        %v505 = vadd.f32 %v504, 1.0
        %v506 = vrcp.pop %v505
        %v507 = vmul.f32 %v505, %v506
        %v508 = vsub.f32 1.0, %v507
        %v509 = vmul.f32 %v506, %v508
        %v510 = vadd.f32 %v506, %v509
        %vm511 = vweird.f32 %v505
        %vm512 = vweird.f32 %v506
        %vm513 = vmor %vm511, %vm512
        %v514 = vsel %vm513, %v506, %v510
        %v515 = vand.u32 2147483647, %v505
        %vm516 = vcmp.eq.f32.partialorder %v515, 8.507059e+37
        %v517 = vand.u32 %v505, 2147483648
        %v518 = vor.u32 1.1754944e-38, %v517
        %v519 = vsel %vm516, %v518, %v514
        %v520 = vmul.f32 1.0, %v519
        %v521 = vxor.u32 %v420, 2147483648
        %v522 = vmul.f32 %v521, 1.442695
        %v523 = vpow.pop %v522
        %v524 = vadd.f32 %v523, 1.0
        %v525 = vrcp.pop %v524
        %v526 = vmul.f32 %v524, %v525
        %v527 = vsub.f32 1.0, %v526
        %v528 = vmul.f32 %v525, %v527
        %v529 = vadd.f32 %v525, %v528
        %vm530 = vweird.f32 %v524
        %vm531 = vweird.f32 %v525
        %vm532 = vmor %vm530, %vm531
        %v533 = vsel %vm532, %v525, %v529
        %v534 = vand.u32 2147483647, %v524
        %vm535 = vcmp.eq.f32.partialorder %v534, 8.507059e+37
        %v536 = vand.u32 %v524, 2147483648
        %v537 = vor.u32 1.1754944e-38, %v536
        %v538 = vsel %vm535, %v537, %v533
        %v539 = vmul.f32 1.0, %v538
        %v540 = vtanh.pop %v460
        %v541 = vxor.u32 %v500, 2147483648
        %v542 = vmul.f32 %v541, 1.442695
        %v543 = vpow.pop %v542
        %v544 = vadd.f32 %v543, 1.0
        %v545 = vrcp.pop %v544
        %v546 = vmul.f32 %v544, %v545
        %v547 = vsub.f32 1.0, %v546
        %v548 = vmul.f32 %v545, %v547
        %v549 = vadd.f32 %v545, %v548
        %vm550 = vweird.f32 %v544
        %vm551 = vweird.f32 %v545
        %vm552 = vmor %vm550, %vm551
        %v553 = vsel %vm552, %v545, %v549
        %v554 = vand.u32 2147483647, %v544
        %vm555 = vcmp.eq.f32.partialorder %v554, 8.507059e+37
        %v556 = vand.u32 %v544, 2147483648
        %v557 = vor.u32 1.1754944e-38, %v556
        %v558 = vsel %vm555, %v557, %v553
        %v559 = vmul.f32 1.0, %v558
        %v560 = vmul.f32 %v539, %v203
        %v561 = vmul.f32 %v520, %v540
        %v562 = vadd.f32 %v560, %v561
        %v563 = vtanh.pop %v562
        %v564 = vmul.f32 %v559, %v563
        %565 = vst [vmem:[#allocation2] sm:$0xff] %v564
        %566 = vst [vmem:[#allocation3] sm:$0xff] %v562
        %p567 = scmp.eq.s32.totalorder %s17, 7
        // Predicated region
        $region41: #{seq2seq_forward.2} parent=31 // pred_check
          %p568 = pneg %p567
        $region42: #{seq2seq_forward.2} parent=31 // pred_check_branch
          %570 = sbr.rel (%p568) target = $region44
        $region43: #{seq2seq_forward.2} parent=31 // pred_region
          %571 = vst [vmem:[%s3] sm:$0xff] %v564
          %572 = vst [vmem:[%s4] sm:$0xff] %v562
        $region44: #{seq2seq_forward.2} parent=31 // pred_fallthru
          _
        // Predicated region
        $region45: #{seq2seq_forward.2} parent=31 // pred_check
          %p573 = pneg %p98
        $region46: #{seq2seq_forward.2} parent=31 // pred_check_branch
          %575 = sbr.rel (%p573) target = $region48
        $region47: #{seq2seq_forward.2} parent=31 // pred_region
          _
        $region48: #{seq2seq_forward.2} parent=31 // pred_fallthru
          _
        // Predicated region
        $region49: #{seq2seq_forward.2} parent=31 // pred_check
          %p576 = pneg %p119
        $region50: #{seq2seq_forward.2} parent=31 // pred_check_branch
          %578 = sbr.rel (%p576) target = $region52
        $region51: #{seq2seq_forward.2} parent=31 // pred_region
          _
        $region52: #{seq2seq_forward.2} parent=31 // pred_fallthru
          _
        // Predicated region
        $region53: #{seq2seq_forward.2} parent=31 // pred_check
          %p579 = pneg %p98
        $region54: #{seq2seq_forward.2} parent=31 // pred_check_branch
          %581 = sbr.rel (%p579) target = $region56
        $region55: #{seq2seq_forward.2} parent=31 // pred_region
          _
        $region56: #{seq2seq_forward.2} parent=31 // pred_fallthru
          _
        // Predicated region
        $region57: #{seq2seq_forward.2} parent=31 // pred_check
          %p582 = pneg %p119
        $region58: #{seq2seq_forward.2} parent=31 // pred_check_branch
          %584 = sbr.rel (%p582) target = $region60
        $region59: #{seq2seq_forward.2} parent=31 // pred_region
          _
        $region60: #{seq2seq_forward.2} parent=31 // pred_fallthru
          _
      $region32: #{seq2seq_forward.2} parent=5 // pred_fallthru
        _
      %p585 = scmp.le.s32.totalorder 2, %s12
      // Predicated region
      $region61: #{seq2seq_forward.2} parent=5 // pred_check
        %p586 = pneg %p585
      $region62: #{seq2seq_forward.2} parent=5 // pred_check_branch
        %588 = sbr.rel (%p586) target = $region64
      $region63: #{seq2seq_forward.2} parent=5 // pred_region
        %s589 = ssub.s32 %s12, 2
      $region64: #{seq2seq_forward.2} parent=5 // pred_fallthru
        _
    $region6: #{seq2seq_forward.2} parent=1 // loop_footer
      %s16 = sadd.s32 1, %s12
    $region7: #{seq2seq_forward.2} parent=1 // loop_footer_branch
      %11 = sbr.rel target = $region3
    $region8: #{seq2seq_forward.2} parent=1 // loop_exit
      _
    %590 = vsyncpa [#allocation5], 1
    %s591 = scalar_lea.sflag [#allocation5], 1
    %592 = vsyncpa %s591, 1

</llo_original>
